<compile_context>
chip_gen: v5e
topology: v5e:2x2
jax: 0.10.0
libtpu: 0.0.40
codegen_flags: <defaults>
</compile_context>

<pallas_src>
import functools

import jax
import jax.numpy as jnp
from jax.experimental import pallas as pl
from jax.experimental.pallas import tpu as pltpu


def _round_up(v, m):
    return ((v + m - 1) // m) * m


# ----------------------------------------------------------------------------
# Fused kernel: conv-as-matmul + ReLU + global-avg-pool + new_fc + consensus
# One grid step handles all `num_segments` images of one batch element.
# ----------------------------------------------------------------------------
def _tsn_fused_kernel(patch_ref, cw_ref, cb_ref, fw_ref, fb_ref, out_ref,
                      *, num_segments, hw):
    # patch_ref: (1, S*HW, Kp)   cw_ref: (Kp, Fp)   cb_ref: (1, Fp)
    # fw_ref:    (Fp, Cp)        fb_ref: (1, Cp)    out_ref: (1, 1, Cp)
    x = patch_ref[0]                                                # (S*HW, Kp)

    # Backbone stand-in: 3x3 conv expressed as one big im2col matmul + ReLU.
    y = jnp.dot(x, cw_ref[...], preferred_element_type=jnp.float32)  # (S*HW, Fp)
    y = jnp.maximum(y + cb_ref[...], 0.0)

    # Global average pool per image (segment).
    feats = jnp.mean(y.reshape(num_segments, hw, y.shape[-1]), axis=1)  # (S, Fp)

    # new_fc linear head (Dropout in eval mode == identity).
    logits = jnp.dot(feats, fw_ref[...],
                     preferred_element_type=jnp.float32) + fb_ref[...]  # (S, Cp)

    # avg consensus over segments (== output.squeeze(1) row for this batch elt)
    out_ref[0] = jnp.mean(logits, axis=0, keepdims=True)               # (1, Cp)


def tsn_fused(patches, cw_p, cb_p, fw_p, fb_p, *, num_segments, hw):
    """patches: (B, S*HW, Kp) f32; padded weights/biases; -> (B, Cp) f32."""
    B, M, Kp = patches.shape
    Fp = cw_p.shape[1]
    Cp = fw_p.shape[1]
    kernel = functools.partial(_tsn_fused_kernel,
                               num_segments=num_segments, hw=hw)
    out = pl.pallas_call(
        kernel,
        out_shape=jax.ShapeDtypeStruct((B, 1, Cp), jnp.float32),
        grid_spec=pltpu.PrefetchScalarGridSpec(
            num_scalar_prefetch=0,
            grid=(B,),
            in_specs=[
                pl.BlockSpec((1, M, Kp), lambda b: (b, 0, 0)),
                pl.BlockSpec((Kp, Fp), lambda b: (0, 0)),
                pl.BlockSpec((1, Fp), lambda b: (0, 0)),
                pl.BlockSpec((Fp, Cp), lambda b: (0, 0)),
                pl.BlockSpec((1, Cp), lambda b: (0, 0)),
            ],
            out_specs=pl.BlockSpec((1, 1, Cp), lambda b: (b, 0, 0)),
        ),
        compiler_params=pltpu.CompilerParams(
            dimension_semantics=("parallel",)),
    )(patches, cw_p, cb_p, fw_p, fb_p)
    return out[:, 0, :]                                              # (B, Cp)


# ----------------------------------------------------------------------------
# Full TSN forward (glue = reshapes / im2col / zero-padding, hot path = Pallas)
# ----------------------------------------------------------------------------
@functools.partial(jax.jit, static_argnames=("num_segments",))
def tsn_forward(x_nchw, conv_w, conv_b, fc_w, fc_b, *, num_segments):
    """
    x_nchw:  (B, num_segments*3, H, W)     RGB, new_length=1 -> sample_len=3
    conv_w:  (feature_dim, 3, 3, 3)        backbone 3x3 conv (PyTorch OIHW)
    conv_b:  (feature_dim,)
    fc_w:    (num_class, feature_dim)      new_fc weight (PyTorch layout)
    fc_b:    (num_class,)
    returns: (B, num_class)
    """
    B = x_nchw.shape[0]
    H, W = x_nchw.shape[-2:]
    Cin = 3
    F = conv_w.shape[0]
    C = fc_w.shape[0]
    HW = H * W
    K = 9 * Cin

    Kp = _round_up(K, 8)        # contraction dim -> multiple of 8 sublanes
    Fp = _round_up(F, 128)      # feature dim    -> lane-dense
    Cp = _round_up(C, 128)      # class dim      -> lane-dense output store

    # input.view((-1, sample_len) + input.size()[-2:]);  NCHW -> NHWC
    x = x_nchw.reshape(B * num_segments, Cin, H, W)
    x = jnp.transpose(x, (0, 2, 3, 1))
    N = x.shape[0]

    # im2col for a 3x3 / stride 1 / pad 1 conv (glue).
    xp = jnp.pad(x, ((0, 0), (1, 1), (1, 1), (0, 0)))
    taps = [xp[:, dy:dy + H, dx:dx + W, :] for dy in range(3) for dx in range(3)]
    patches = jnp.concatenate(taps, axis=-1).reshape(N, HW, K)
    patches = jnp.pad(patches, ((0, 0), (0, 0), (0, Kp - K)))
    patches = patches.reshape(B, num_segments * HW, Kp)

    # conv weight (O, I, Ky, Kx) -> (Ky*Kx*I, O) matching the tap/channel order,
    # then zero-pad to (Kp, Fp).  Padded rows/cols are zero => no effect.
    w_flat = jnp.transpose(conv_w, (2, 3, 1, 0)).reshape(K, F)
    cw_p = jnp.zeros((Kp, Fp), jnp.float32).at[:K, :F].set(w_flat)
    cb_p = jnp.zeros((1, Fp), jnp.float32).at[0, :F].set(conv_b)

    # new_fc weight (C, F) -> (Fp, Cp) zero-padded transpose; bias -> (1, Cp).
    fw_p = jnp.zeros((Fp, Cp), jnp.float32).at[:F, :C].set(fc_w.T)
    fb_p = jnp.zeros((1, Cp), jnp.float32).at[0, :C].set(fc_b)

    out_p = tsn_fused(patches, cw_p, cb_p, fw_p, fb_p,
                      num_segments=num_segments, hw=HW)              # (B, Cp)
    return out_p[:, :C]                                              # (B, C)


# ----------------------------------------------------------------------------
# Pure-JAX reference for validation
# ----------------------------------------------------------------------------
def tsn_reference(x_nchw, conv_w, conv_b, fc_w, fc_b, num_segments):
    B = x_nchw.shape[0]
    H, W = x_nchw.shape[-2:]
    x = x_nchw.reshape(B * num_segments, 3, H, W)
    y = jax.lax.conv_general_dilated(
        x, conv_w, window_strides=(1, 1), padding="SAME",
        dimension_numbers=("NCHW", "OIHW", "NCHW"))
    y = jnp.maximum(y + conv_b[None, :, None, None], 0.0)
    feats = jnp.mean(y, axis=(2, 3))                                 # (N, F)
    logits = feats @ fc_w.T + fc_b                                   # (N, C)
    logits = logits.reshape(B, num_segments, -1)
    return jnp.mean(logits, axis=1)                                  # (B, C)


if __name__ == "__main__":
    # Small TSN config: RGB, new_length=1 (sample_len=3), avg consensus.
    batch = 2
    num_segments = 8
    num_class = 8
    feature_dim = 32
    H = W = 16

    key = jax.random.PRNGKey(0)
    k_x, k_cw, k_cb, k_fw = jax.random.split(key, 4)

    # Input: (B, num_segments * 3, H, W) in NCHW like the PyTorch module.
    x = jax.random.normal(k_x, (batch, num_segments * 3, H, W), jnp.float32)

    # Backbone stand-in conv parameters.
    conv_w = jax.random.normal(k_cw, (feature_dim, 3, 3, 3), jnp.float32) * 0.1
    conv_b = jax.random.normal(k_cb, (feature_dim,), jnp.float32) * 0.1

    # new_fc: weight ~ N(0, 0.001), bias = 0  (matches _prepare_tsn init).
    fc_w = jax.random.normal(k_fw, (num_class, feature_dim), jnp.float32) * 0.001
    fc_b = jnp.zeros((num_class,), jnp.float32)

    out = tsn_forward(x, conv_w, conv_b, fc_w, fc_b, num_segments=num_segments)
    out = jax.block_until_ready(out)

    ref = tsn_reference(x, conv_w, conv_b, fc_w, fc_b, num_segments)
    assert out.shape == (batch, num_class)
    assert jnp.allclose(out, ref, atol=2e-5, rtol=1e-5), "mismatch vs reference"

    print("KERNEL_OK")
</pallas_src>

<mosaic_0001>
module attributes {stable_mosaic.version = 11 : i64} {
  func.func @_tsn_fused_kernel(%arg0: i32, %arg1: memref<1x2048x32xf32, #tpu.memory_space<vmem>>, %arg2: memref<32x128xf32, #tpu.memory_space<vmem>>, %arg3: memref<1x128xf32, #tpu.memory_space<vmem>>, %arg4: memref<128x128xf32, #tpu.memory_space<vmem>>, %arg5: memref<1x128xf32, #tpu.memory_space<vmem>>, %arg6: memref<1x1x128xf32, #tpu.memory_space<vmem>>) attributes {dimension_semantics = [#tpu.dimension_semantics<parallel>], iteration_bounds = array<i64: 2>, scalar_prefetch = 0 : i64, scratch_operands = 0 : i64, tpu.core_type = #tpu.core_type<tc>, window_params = [{transform_indices = @transform_0, window_bounds = array<i64: 1, 2048, 32>}, {pipeline_mode = #tpu.pipeline_mode<synchronous>, transform_indices = @transform_1, window_bounds = array<i64: 32, 128>}, {pipeline_mode = #tpu.pipeline_mode<synchronous>, transform_indices = @transform_2, window_bounds = array<i64: 1, 128>}, {pipeline_mode = #tpu.pipeline_mode<synchronous>, transform_indices = @transform_3, window_bounds = array<i64: 128, 128>}, {pipeline_mode = #tpu.pipeline_mode<synchronous>, transform_indices = @transform_4, window_bounds = array<i64: 1, 128>}, {transform_indices = @transform_5, window_bounds = array<i64: 1, 1, 128>}]} {
    %c0 = arith.constant 0 : index
    %c0_0 = arith.constant 0 : index
    %c0_1 = arith.constant 0 : index
    %0 = vector.load %arg1[%c0, %c0_0, %c0_1] : memref<1x2048x32xf32, #tpu.memory_space<vmem>>, vector<1x2048x32xf32>
    %1 = vector.shape_cast %0 : vector<1x2048x32xf32> to vector<2048x32xf32>
    %c0_2 = arith.constant 0 : index
    %c0_3 = arith.constant 0 : index
    %2 = vector.load %arg2[%c0_2, %c0_3] : memref<32x128xf32, #tpu.memory_space<vmem>>, vector<32x128xf32>
    %cst = arith.constant dense<0.000000e+00> : vector<2048x128xf32>
    %3 = tpu.matmul %1, %2, %cst {dimension_numbers = #tpu.dot_dimension_numbers<[1], [0], [0], [1], [0, 0, 1, 1], [], []>} : vector<2048x32xf32>, vector<32x128xf32>, vector<2048x128xf32> -> vector<2048x128xf32>
    %c0_4 = arith.constant 0 : index
    %c0_5 = arith.constant 0 : index
    %4 = vector.load %arg3[%c0_4, %c0_5] : memref<1x128xf32, #tpu.memory_space<vmem>>, vector<1x128xf32>
    %5 = vector.broadcast %4 : vector<1x128xf32> to vector<2048x128xf32>
    %6 = arith.addf %3, %5 : vector<2048x128xf32>
    %cst_6 = arith.constant 0.000000e+00 : f32
    %7 = vector.broadcast %cst_6 : f32 to vector<2048x128xf32>
    %8 = arith.maximumf %6, %7 : vector<2048x128xf32>
    %9 = vector.shape_cast %8 : vector<2048x128xf32> to vector<8x256x128xf32>
    %cst_7 = arith.constant dense<0.000000e+00> : vector<8x128xf32>
    %10 = vector.multi_reduction <add>, %9, %cst_7 [1] : vector<8x256x128xf32> to vector<8x128xf32>
    %cst_8 = arith.constant 2.560000e+02 : f32
    %11 = vector.broadcast %cst_8 : f32 to vector<8x128xf32>
    %12 = arith.divf %10, %11 : vector<8x128xf32>
    %c0_9 = arith.constant 0 : index
    %c0_10 = arith.constant 0 : index
    %13 = vector.load %arg4[%c0_9, %c0_10] : memref<128x128xf32, #tpu.memory_space<vmem>>, vector<128x128xf32>
    %cst_11 = arith.constant dense<0.000000e+00> : vector<8x128xf32>
    %14 = tpu.matmul %12, %13, %cst_11 {dimension_numbers = #tpu.dot_dimension_numbers<[1], [0], [0], [1], [0, 0, 1, 1], [], []>} : vector<8x128xf32>, vector<128x128xf32>, vector<8x128xf32> -> vector<8x128xf32>
    %c0_12 = arith.constant 0 : index
    %c0_13 = arith.constant 0 : index
    %15 = vector.load %arg5[%c0_12, %c0_13] : memref<1x128xf32, #tpu.memory_space<vmem>>, vector<1x128xf32>
    %16 = vector.broadcast %15 : vector<1x128xf32> to vector<8x128xf32>
    %17 = arith.addf %14, %16 : vector<8x128xf32>
    %cst_14 = arith.constant dense<0.000000e+00> : vector<128xf32>
    %18 = vector.multi_reduction <add>, %17, %cst_14 [0] : vector<8x128xf32> to vector<128xf32>
    %19 = vector.shape_cast %18 : vector<128xf32> to vector<1x128xf32>
    %cst_15 = arith.constant 8.000000e+00 : f32
    %20 = vector.broadcast %cst_15 : f32 to vector<1x128xf32>
    %21 = arith.divf %19, %20 : vector<1x128xf32>
    %c0_16 = arith.constant 0 : index
    %c0_17 = arith.constant 0 : index
    %c0_18 = arith.constant 0 : index
    %22 = vector.load %arg6[%c0_16, %c0_17, %c0_18] : memref<1x1x128xf32, #tpu.memory_space<vmem>>, vector<1x1x128xf32>
    %23 = vector.shape_cast %22 : vector<1x1x128xf32> to vector<1x128xf32>
    %24 = vector.shape_cast %21 : vector<1x128xf32> to vector<1x1x128xf32>
    tpu.vector_store %arg6[%c0_16, %c0_17, %c0_18], %24 {strides = array<i32>} : memref<1x1x128xf32, #tpu.memory_space<vmem>>, vector<1x1x128xf32>,
    return
  }
  func.func @transform_0(%arg0: i32) -> (i32, i32, i32) {
    %c0_i32 = arith.constant 0 : i32
    %c0_i32_0 = arith.constant 0 : i32
    %c0_i32_1 = arith.constant 0 : i32
    return %arg0, %c0_i32, %c0_i32_0 : i32, i32, i32
  }
  func.func @transform_1(%arg0: i32) -> (i32, i32) {
    %c0_i32 = arith.constant 0 : i32
    %c0_i32_0 = arith.constant 0 : i32
    %c0_i32_1 = arith.constant 0 : i32
    return %c0_i32, %c0_i32_0 : i32, i32
  }
  func.func @transform_2(%arg0: i32) -> (i32, i32) {
    %c0_i32 = arith.constant 0 : i32
    %c0_i32_0 = arith.constant 0 : i32
    %c0_i32_1 = arith.constant 0 : i32
    return %c0_i32, %c0_i32_0 : i32, i32
  }
  func.func @transform_3(%arg0: i32) -> (i32, i32) {
    %c0_i32 = arith.constant 0 : i32
    %c0_i32_0 = arith.constant 0 : i32
    %c0_i32_1 = arith.constant 0 : i32
    return %c0_i32, %c0_i32_0 : i32, i32
  }
  func.func @transform_4(%arg0: i32) -> (i32, i32) {
    %c0_i32 = arith.constant 0 : i32
    %c0_i32_0 = arith.constant 0 : i32
    %c0_i32_1 = arith.constant 0 : i32
    return %c0_i32, %c0_i32_0 : i32, i32
  }
  func.func @transform_5(%arg0: i32) -> (i32, i32, i32) {
    %c0_i32 = arith.constant 0 : i32
    %c0_i32_0 = arith.constant 0 : i32
    %c0_i32_1 = arith.constant 0 : i32
    return %arg0, %c0_i32, %c0_i32_0 : i32, i32, i32
  }
}

</mosaic_0001>

<llo_original>
// kernel: tsn_forward.1
$region0: #{tsn_forward.1}
  #allocation0 [shape = 'u32[]', space=smem, size = 0x4, offset = 0x4, fixed_abs, tag = 'smem constant byte address 0x4 - core index']
  #allocation1 [shape = 'u32[72,128]{1,0:T(1,128)}', space=vmem, size = 0x9000, scoped, tag = 'internal scratch']
  %s0 = inlined_call_operand.vmem [shape: f32[2,2048,32], index: 0, kind: input, shape index: {}]
  %s1 = inlined_call_operand.vmem [shape: f32[32,128], index: 1, kind: input, shape index: {}]
  %s2 = inlined_call_operand.vmem [shape: f32[1,128], index: 2, kind: input, shape index: {}]
  %s3 = inlined_call_operand.vmem [shape: f32[128,128], index: 3, kind: input, shape index: {}]
  %s4 = inlined_call_operand.vmem [shape: f32[1,128], index: 4, kind: input, shape index: {}]
  %s5 = inlined_call_operand.hbm [shape: f32[2,1,128], index: 5, kind: output, shape index: {}]
  %s6 = sld [smem:[#allocation0]]
  $region53: #{tsn_forward.1} parent=0
    _
  %s8 = ssub.s32 1, %s6
  %s9 = scalar_select 0, %s8, %s6
  $region1: #{tsn_forward.1} parent=0
    #allocation2 [shape = 'u8[1024]{0}', space=vmem, size = 0x400, scoped, tag = 'output window, operand 0']
    #allocation3 [shape = 's32[2]{0}', space=sflag, size = 0x8, scoped, tag = 'scoped memory for tsn_forward.1']
    %10 = vsyncpa [#allocation3], 0
    %s11 = scalar_lea.sflag [#allocation3], 1
    %12 = vsyncpa %s11, 0
    loop: start=0, step=1, limit=4
    $region2: #{tsn_forward.1} parent=1 // loop_pre_header
      _
    $region3: #{tsn_forward.1} parent=1 // loop_header
      %s14 = sphi 0, %s18
      %p15 = scmp.ge.s32.totalorder %s14, 4
      %s24 = sphi 0, %s26
      %s27 = sphi 0, %s24
      %s28 = sphi 0, %s27
      %s44 = sphi 0, %s28
      %s48 = sphi 0, %s48
      %s50 = sphi 0, %s48
      %s51 = sphi 0, %s50
      %s65 = sphi 0, %s51
      %s69 = sphi 0, %s69
      %s71 = sphi 0, %s69
      %s72 = sphi 0, %s71
      %s86 = sphi 0, %s72
      %s90 = sphi 0, %s90
      %s92 = sphi 0, %s90
      %s93 = sphi 0, %s92
      %s107 = sphi 0, %s93
      %s111 = sphi 0, %s111
      %s113 = sphi 0, %s111
      %s114 = sphi 0, %s113
      %s128 = sphi 0, %s114
      %s134 = sphi 0, %s136
      %s137 = sphi 0, %s134
      %s138 = sphi 0, %s137
      %s154 = sphi 0, %s138
    $region4: #{tsn_forward.1} parent=1 // loop_header_branch
      %17 = sbr.rel (%p15) target = $region8
    $region5: #{tsn_forward.1} parent=1 // loop_body
      %s19 = ssub.s32 %s14, 1
      %s20 = ssub.s32 %s14, 2
      %s21 = sadd.s32 %s14, 1
      %s22 = ssub.s32 %s14, %s21
      %p23 = scmp.eq.s32.totalorder %s22, 0
      %s25 = sadd.s32 %s24, 1
      %s26 = scalar_select %p23, %s24, %s25
      %p29 = pneg %p23
      %p30 = scmp.eq.s32.totalorder %s14, 1
      %p31 = por %p29, %p30
      %p32 = scmp.ne.s32.totalorder %s24, %s27
      %p33 = scmp.eq.s32.totalorder %s14, 0
      %p34 = por %p32, %p33
      %p35 = scmp.ne.s32.totalorder %s24, %s27
      %p36 = scmp.eq.s32.totalorder %s19, 1
      %p37 = por %p35, %p36
      %p38 = scmp.ne.s32.totalorder %s27, %s28
      %p39 = scmp.eq.s32.totalorder %s19, 0
      %p40 = por %p38, %p39
      %p41 = scmp.ne.s32.totalorder %s27, %s28
      %p42 = scmp.eq.s32.totalorder %s20, 1
      %p43 = por %p41, %p42
      %p45 = scmp.ne.s32.totalorder %s28, %s44
      %p46 = scmp.eq.s32.totalorder %s20, 0
      %p47 = por %p45, %p46
      %s49 = sadd.s32 %s48, 1
      %p52 = scmp.eq.s32.totalorder %s14, 1
      %p53 = scmp.ne.s32.totalorder %s48, %s50
      %p54 = scmp.eq.s32.totalorder %s14, 0
      %p55 = por %p53, %p54
      %p56 = scmp.ne.s32.totalorder %s48, %s50
      %p57 = scmp.eq.s32.totalorder %s19, 1
      %p58 = por %p56, %p57
      %p59 = scmp.ne.s32.totalorder %s50, %s51
      %p60 = scmp.eq.s32.totalorder %s19, 0
      %p61 = por %p59, %p60
      %p62 = scmp.ne.s32.totalorder %s50, %s51
      %p63 = scmp.eq.s32.totalorder %s20, 1
      %p64 = por %p62, %p63
      %p66 = scmp.ne.s32.totalorder %s51, %s65
      %p67 = scmp.eq.s32.totalorder %s20, 0
      %p68 = por %p66, %p67
      %s70 = sadd.s32 %s69, 1
      %p73 = scmp.eq.s32.totalorder %s14, 1
      %p74 = scmp.ne.s32.totalorder %s69, %s71
      %p75 = scmp.eq.s32.totalorder %s14, 0
      %p76 = por %p74, %p75
      %p77 = scmp.ne.s32.totalorder %s69, %s71
      %p78 = scmp.eq.s32.totalorder %s19, 1
      %p79 = por %p77, %p78
      %p80 = scmp.ne.s32.totalorder %s71, %s72
      %p81 = scmp.eq.s32.totalorder %s19, 0
      %p82 = por %p80, %p81
      %p83 = scmp.ne.s32.totalorder %s71, %s72
      %p84 = scmp.eq.s32.totalorder %s20, 1
      %p85 = por %p83, %p84
      %p87 = scmp.ne.s32.totalorder %s72, %s86
      %p88 = scmp.eq.s32.totalorder %s20, 0
      %p89 = por %p87, %p88
      %s91 = sadd.s32 %s90, 1
      %p94 = scmp.eq.s32.totalorder %s14, 1
      %p95 = scmp.ne.s32.totalorder %s90, %s92
      %p96 = scmp.eq.s32.totalorder %s14, 0
      %p97 = por %p95, %p96
      %p98 = scmp.ne.s32.totalorder %s90, %s92
      %p99 = scmp.eq.s32.totalorder %s19, 1
      %p100 = por %p98, %p99
      %p101 = scmp.ne.s32.totalorder %s92, %s93
      %p102 = scmp.eq.s32.totalorder %s19, 0
      %p103 = por %p101, %p102
      %p104 = scmp.ne.s32.totalorder %s92, %s93
      %p105 = scmp.eq.s32.totalorder %s20, 1
      %p106 = por %p104, %p105
      %p108 = scmp.ne.s32.totalorder %s93, %s107
      %p109 = scmp.eq.s32.totalorder %s20, 0
      %p110 = por %p108, %p109
      %s112 = sadd.s32 %s111, 1
      %p115 = scmp.eq.s32.totalorder %s14, 1
      %p116 = scmp.ne.s32.totalorder %s111, %s113
      %p117 = scmp.eq.s32.totalorder %s14, 0
      %p118 = por %p116, %p117
      %p119 = scmp.ne.s32.totalorder %s111, %s113
      %p120 = scmp.eq.s32.totalorder %s19, 1
      %p121 = por %p119, %p120
      %p122 = scmp.ne.s32.totalorder %s113, %s114
      %p123 = scmp.eq.s32.totalorder %s19, 0
      %p124 = por %p122, %p123
      %p125 = scmp.ne.s32.totalorder %s113, %s114
      %p126 = scmp.eq.s32.totalorder %s20, 1
      %p127 = por %p125, %p126
      %p129 = scmp.ne.s32.totalorder %s114, %s128
      %p130 = scmp.eq.s32.totalorder %s20, 0
      %p131 = por %p129, %p130
      %s132 = ssub.s32 %s14, %s21
      %p133 = scmp.eq.s32.totalorder %s132, 0
      %s135 = sadd.s32 %s134, 1
      %s136 = scalar_select %p133, %s134, %s135
      %p139 = pneg %p133
      %p140 = scmp.eq.s32.totalorder %s14, 1
      %p141 = por %p139, %p140
      %p142 = scmp.ne.s32.totalorder %s134, %s137
      %p143 = scmp.eq.s32.totalorder %s14, 0
      %p144 = por %p142, %p143
      %p145 = scmp.ne.s32.totalorder %s134, %s137
      %p146 = scmp.eq.s32.totalorder %s19, 1
      %p147 = por %p145, %p146
      %p148 = scmp.ne.s32.totalorder %s137, %s138
      %p149 = scmp.eq.s32.totalorder %s19, 0
      %p150 = por %p148, %p149
      %p151 = scmp.ne.s32.totalorder %s137, %s138
      %p152 = scmp.eq.s32.totalorder %s20, 1
      %p153 = por %p151, %p152
      %p155 = scmp.ne.s32.totalorder %s138, %s154
      %p156 = scmp.eq.s32.totalorder %s20, 0
      %p157 = por %p155, %p156
      %p158 = scmp.le.s32.totalorder 1, %s14
      %p159 = scmp.lt.s32.totalorder %s14, 3
      %p160 = pnand %p158, %p159
      %p161 = pneg %p160
      // Predicated region
      $region9: #{tsn_forward.1} parent=5 // pred_check
        _
      $region10: #{tsn_forward.1} parent=5 // pred_check_branch
        %163 = sbr.rel (%p160) target = $region12
      $region11: #{tsn_forward.1} parent=5 // pred_region
        %s164 = ssub.s32 %s14, 1
        // Predicated region
        $region13: #{tsn_forward.1} parent=11 // pred_check
          %p165 = pneg %p61
        $region14: #{tsn_forward.1} parent=11 // pred_check_branch
          %167 = sbr.rel (%p165) target = $region16
        $region15: #{tsn_forward.1} parent=11 // pred_region
          _
        $region16: #{tsn_forward.1} parent=11 // pred_fallthru
          _
        // Predicated region
        $region17: #{tsn_forward.1} parent=11 // pred_check
          %p168 = pneg %p82
        $region18: #{tsn_forward.1} parent=11 // pred_check_branch
          %170 = sbr.rel (%p168) target = $region20
        $region19: #{tsn_forward.1} parent=11 // pred_region
          _
        $region20: #{tsn_forward.1} parent=11 // pred_fallthru
          _
        // Predicated region
        $region21: #{tsn_forward.1} parent=11 // pred_check
          %p171 = pneg %p103
        $region22: #{tsn_forward.1} parent=11 // pred_check_branch
          %173 = sbr.rel (%p171) target = $region24
        $region23: #{tsn_forward.1} parent=11 // pred_region
          _
        $region24: #{tsn_forward.1} parent=11 // pred_fallthru
          _
        // Predicated region
        $region25: #{tsn_forward.1} parent=11 // pred_check
          %p174 = pneg %p124
        $region26: #{tsn_forward.1} parent=11 // pred_check_branch
          %176 = sbr.rel (%p174) target = $region28
        $region27: #{tsn_forward.1} parent=11 // pred_region
          _
        $region28: #{tsn_forward.1} parent=11 // pred_fallthru
          _
      $region12: #{tsn_forward.1} parent=5 // pred_fallthru
        _
      %p177 = scmp.lt.s32.totalorder %s14, 2
      // Predicated region
      $region29: #{tsn_forward.1} parent=5 // pred_check
        %p178 = pneg %p177
      $region30: #{tsn_forward.1} parent=5 // pred_check_branch
        %180 = sbr.rel (%p178) target = $region32
      $region31: #{tsn_forward.1} parent=5 // pred_region
        // Predicated region
        $region33: #{tsn_forward.1} parent=31 // pred_check
          %p181 = pneg %p34
        $region34: #{tsn_forward.1} parent=31 // pred_check_branch
          %183 = sbr.rel (%p181) target = $region36
        $region35: #{tsn_forward.1} parent=31 // pred_region
          %p184 = scmp.lt.s32.totalorder %s14, 1
          %s185 = scalar_select %p184, %s14, 1
          %s186 = smul.addr %s185, 256
          %s187 = smul.addr %s186, 8
          %s188 = scalar_lea.vmem %s0, %s187
        $region36: #{tsn_forward.1} parent=31 // pred_fallthru
          _
      $region32: #{tsn_forward.1} parent=5 // pred_fallthru
        _
      %p189 = scmp.le.s32.totalorder 1, %s14
      %p190 = scmp.lt.s32.totalorder %s14, 3
      %p191 = pnand %p189, %p190
      %p192 = pneg %p191
      // Predicated region
      $region37: #{tsn_forward.1} parent=5 // pred_check
        _
      $region38: #{tsn_forward.1} parent=5 // pred_check_branch
        %194 = sbr.rel (%p191) target = $region40
      $region39: #{tsn_forward.1} parent=5 // pred_region
        %s195 = ssub.s32 %s14, 1
        %p196 = scmp.lt.s32.totalorder %s19, 1
        %s197 = scalar_select %p196, %s19, 1
        %s198 = smul.addr %s197, 256
        %s199 = smul.addr %s198, 8
        %s200 = scalar_lea.vmem %s0, %s199
        %p201 = pneg %p40
        %p202 = pneg %p37
        %p203 = pneg %p61
        %p204 = pneg %p58
        %p205 = pneg %p82
        %p206 = pneg %p79
        %p207 = pneg %p103
        %p208 = pneg %p100
        %p209 = pneg %p124
        %p210 = pneg %p121
        %p211 = pneg %p150
        %p212 = pneg %p147
        %s213 = sand.u32 %s137, 1
        %s214 = scalar_lea.sflag [#allocation3], %s213
        %s215 = sand.u32 %s137, 1
        %s216 = scalar_lea.vmem [#allocation2], %s215
        %p217 = scmp.lt.s32.totalorder %s19, 1
        %s218 = scalar_select %p217, %s19, 1
        %s219 = smul.addr %s218, 256
        %s220 = smul.addr %s219, 8
        %s221 = scalar_lea.vmem %s0, %s220
        %v222 = vld [vmem:[%s221] sm:$0xff]
        %v223 = vld [vmem:[%s221 + $0x8] sm:$0xff]
        %v224 = vld [vmem:[%s221 + $0x10] sm:$0xff]
        %v225 = vld [vmem:[%s221 + $0x18] sm:$0xff]
        %v226 = vld [vmem:[%s221 + $0x20] sm:$0xff]
        %v227 = vld [vmem:[%s221 + $0x28] sm:$0xff]
        %v228 = vld [vmem:[%s221 + $0x30] sm:$0xff]
        %v229 = vld [vmem:[%s221 + $0x38] sm:$0xff]
        %v230 = vld [vmem:[%s221 + $0x40] sm:$0xff]
        %v231 = vld [vmem:[%s221 + $0x48] sm:$0xff]
        %v232 = vld [vmem:[%s221 + $0x50] sm:$0xff]
        %v233 = vld [vmem:[%s221 + $0x58] sm:$0xff]
        %v234 = vld [vmem:[%s221 + $0x60] sm:$0xff]
        %v235 = vld [vmem:[%s221 + $0x68] sm:$0xff]
        %v236 = vld [vmem:[%s221 + $0x70] sm:$0xff]
        %v237 = vld [vmem:[%s221 + $0x78] sm:$0xff]
        %v238 = vld [vmem:[%s221 + $0x80] sm:$0xff]
        %v239 = vld [vmem:[%s221 + $0x88] sm:$0xff]
        %v240 = vld [vmem:[%s221 + $0x90] sm:$0xff]
        %v241 = vld [vmem:[%s221 + $0x98] sm:$0xff]
        %v242 = vld [vmem:[%s221 + $0xa0] sm:$0xff]
        %v243 = vld [vmem:[%s221 + $0xa8] sm:$0xff]
        %v244 = vld [vmem:[%s221 + $0xb0] sm:$0xff]
        %v245 = vld [vmem:[%s221 + $0xb8] sm:$0xff]
        %v246 = vld [vmem:[%s221 + $0xc0] sm:$0xff]
        %v247 = vld [vmem:[%s221 + $0xc8] sm:$0xff]
        %v248 = vld [vmem:[%s221 + $0xd0] sm:$0xff]
        %v249 = vld [vmem:[%s221 + $0xd8] sm:$0xff]
        %v250 = vld [vmem:[%s221 + $0xe0] sm:$0xff]
        %v251 = vld [vmem:[%s221 + $0xe8] sm:$0xff]
        %v252 = vld [vmem:[%s221 + $0xf0] sm:$0xff]
        %v253 = vld [vmem:[%s221 + $0xf8] sm:$0xff]
        %v254 = vld [vmem:[%s221 + $0x100] sm:$0xff]
        %v255 = vld [vmem:[%s221 + $0x108] sm:$0xff]
        %v256 = vld [vmem:[%s221 + $0x110] sm:$0xff]
        %v257 = vld [vmem:[%s221 + $0x118] sm:$0xff]
        %v258 = vld [vmem:[%s221 + $0x120] sm:$0xff]
        %v259 = vld [vmem:[%s221 + $0x128] sm:$0xff]
        %v260 = vld [vmem:[%s221 + $0x130] sm:$0xff]
        %v261 = vld [vmem:[%s221 + $0x138] sm:$0xff]
        %v262 = vld [vmem:[%s221 + $0x140] sm:$0xff]
        %v263 = vld [vmem:[%s221 + $0x148] sm:$0xff]
        %v264 = vld [vmem:[%s221 + $0x150] sm:$0xff]
        %v265 = vld [vmem:[%s221 + $0x158] sm:$0xff]
        %v266 = vld [vmem:[%s221 + $0x160] sm:$0xff]
        %v267 = vld [vmem:[%s221 + $0x168] sm:$0xff]
        %v268 = vld [vmem:[%s221 + $0x170] sm:$0xff]
        %v269 = vld [vmem:[%s221 + $0x178] sm:$0xff]
        %v270 = vld [vmem:[%s221 + $0x180] sm:$0xff]
        %v271 = vld [vmem:[%s221 + $0x188] sm:$0xff]
        %v272 = vld [vmem:[%s221 + $0x190] sm:$0xff]
        %v273 = vld [vmem:[%s221 + $0x198] sm:$0xff]
        %v274 = vld [vmem:[%s221 + $0x1a0] sm:$0xff]
        %v275 = vld [vmem:[%s221 + $0x1a8] sm:$0xff]
        %v276 = vld [vmem:[%s221 + $0x1b0] sm:$0xff]
        %v277 = vld [vmem:[%s221 + $0x1b8] sm:$0xff]
        %v278 = vld [vmem:[%s221 + $0x1c0] sm:$0xff]
        %v279 = vld [vmem:[%s221 + $0x1c8] sm:$0xff]
        %v280 = vld [vmem:[%s221 + $0x1d0] sm:$0xff]
        %v281 = vld [vmem:[%s221 + $0x1d8] sm:$0xff]
        %v282 = vld [vmem:[%s221 + $0x1e0] sm:$0xff]
        %v283 = vld [vmem:[%s221 + $0x1e8] sm:$0xff]
        %v284 = vld [vmem:[%s221 + $0x1f0] sm:$0xff]
        %v285 = vld [vmem:[%s221 + $0x1f8] sm:$0xff]
        %v286 = vld [vmem:[%s221 + $0x200] sm:$0xff]
        %v287 = vld [vmem:[%s221 + $0x208] sm:$0xff]
        %v288 = vld [vmem:[%s221 + $0x210] sm:$0xff]
        %v289 = vld [vmem:[%s221 + $0x218] sm:$0xff]
        %v290 = vld [vmem:[%s221 + $0x220] sm:$0xff]
        %v291 = vld [vmem:[%s221 + $0x228] sm:$0xff]
        %v292 = vld [vmem:[%s221 + $0x230] sm:$0xff]
        %v293 = vld [vmem:[%s221 + $0x238] sm:$0xff]
        %v294 = vld [vmem:[%s221 + $0x240] sm:$0xff]
        %v295 = vld [vmem:[%s221 + $0x248] sm:$0xff]
        %v296 = vld [vmem:[%s221 + $0x250] sm:$0xff]
        %v297 = vld [vmem:[%s221 + $0x258] sm:$0xff]
        %v298 = vld [vmem:[%s221 + $0x260] sm:$0xff]
        %v299 = vld [vmem:[%s221 + $0x268] sm:$0xff]
        %v300 = vld [vmem:[%s221 + $0x270] sm:$0xff]
        %v301 = vld [vmem:[%s221 + $0x278] sm:$0xff]
        %v302 = vld [vmem:[%s221 + $0x280] sm:$0xff]
        %v303 = vld [vmem:[%s221 + $0x288] sm:$0xff]
        %v304 = vld [vmem:[%s221 + $0x290] sm:$0xff]
        %v305 = vld [vmem:[%s221 + $0x298] sm:$0xff]
        %v306 = vld [vmem:[%s221 + $0x2a0] sm:$0xff]
        %v307 = vld [vmem:[%s221 + $0x2a8] sm:$0xff]
        %v308 = vld [vmem:[%s221 + $0x2b0] sm:$0xff]
        %v309 = vld [vmem:[%s221 + $0x2b8] sm:$0xff]
        %v310 = vld [vmem:[%s221 + $0x2c0] sm:$0xff]
        %v311 = vld [vmem:[%s221 + $0x2c8] sm:$0xff]
        %v312 = vld [vmem:[%s221 + $0x2d0] sm:$0xff]
        %v313 = vld [vmem:[%s221 + $0x2d8] sm:$0xff]
        %v314 = vld [vmem:[%s221 + $0x2e0] sm:$0xff]
        %v315 = vld [vmem:[%s221 + $0x2e8] sm:$0xff]
        %v316 = vld [vmem:[%s221 + $0x2f0] sm:$0xff]
        %v317 = vld [vmem:[%s221 + $0x2f8] sm:$0xff]
        %v318 = vld [vmem:[%s221 + $0x300] sm:$0xff]
        %v319 = vld [vmem:[%s221 + $0x308] sm:$0xff]
        %v320 = vld [vmem:[%s221 + $0x310] sm:$0xff]
        %v321 = vld [vmem:[%s221 + $0x318] sm:$0xff]
        %v322 = vld [vmem:[%s221 + $0x320] sm:$0xff]
        %v323 = vld [vmem:[%s221 + $0x328] sm:$0xff]
        %v324 = vld [vmem:[%s221 + $0x330] sm:$0xff]
        %v325 = vld [vmem:[%s221 + $0x338] sm:$0xff]
        %v326 = vld [vmem:[%s221 + $0x340] sm:$0xff]
        %v327 = vld [vmem:[%s221 + $0x348] sm:$0xff]
        %v328 = vld [vmem:[%s221 + $0x350] sm:$0xff]
        %v329 = vld [vmem:[%s221 + $0x358] sm:$0xff]
        %v330 = vld [vmem:[%s221 + $0x360] sm:$0xff]
        %v331 = vld [vmem:[%s221 + $0x368] sm:$0xff]
        %v332 = vld [vmem:[%s221 + $0x370] sm:$0xff]
        %v333 = vld [vmem:[%s221 + $0x378] sm:$0xff]
        %v334 = vld [vmem:[%s221 + $0x380] sm:$0xff]
        %v335 = vld [vmem:[%s221 + $0x388] sm:$0xff]
        %v336 = vld [vmem:[%s221 + $0x390] sm:$0xff]
        %v337 = vld [vmem:[%s221 + $0x398] sm:$0xff]
        %v338 = vld [vmem:[%s221 + $0x3a0] sm:$0xff]
        %v339 = vld [vmem:[%s221 + $0x3a8] sm:$0xff]
        %v340 = vld [vmem:[%s221 + $0x3b0] sm:$0xff]
        %v341 = vld [vmem:[%s221 + $0x3b8] sm:$0xff]
        %v342 = vld [vmem:[%s221 + $0x3c0] sm:$0xff]
        %v343 = vld [vmem:[%s221 + $0x3c8] sm:$0xff]
        %v344 = vld [vmem:[%s221 + $0x3d0] sm:$0xff]
        %v345 = vld [vmem:[%s221 + $0x3d8] sm:$0xff]
        %v346 = vld [vmem:[%s221 + $0x3e0] sm:$0xff]
        %v347 = vld [vmem:[%s221 + $0x3e8] sm:$0xff]
        %v348 = vld [vmem:[%s221 + $0x3f0] sm:$0xff]
        %v349 = vld [vmem:[%s221 + $0x3f8] sm:$0xff]
        %v350 = vld [vmem:[%s221 + $0x400] sm:$0xff]
        %v351 = vld [vmem:[%s221 + $0x408] sm:$0xff]
        %v352 = vld [vmem:[%s221 + $0x410] sm:$0xff]
        %v353 = vld [vmem:[%s221 + $0x418] sm:$0xff]
        %v354 = vld [vmem:[%s221 + $0x420] sm:$0xff]
        %v355 = vld [vmem:[%s221 + $0x428] sm:$0xff]
        %v356 = vld [vmem:[%s221 + $0x430] sm:$0xff]
        %v357 = vld [vmem:[%s221 + $0x438] sm:$0xff]
        %v358 = vld [vmem:[%s221 + $0x440] sm:$0xff]
        %v359 = vld [vmem:[%s221 + $0x448] sm:$0xff]
        %v360 = vld [vmem:[%s221 + $0x450] sm:$0xff]
        %v361 = vld [vmem:[%s221 + $0x458] sm:$0xff]
        %v362 = vld [vmem:[%s221 + $0x460] sm:$0xff]
        %v363 = vld [vmem:[%s221 + $0x468] sm:$0xff]
        %v364 = vld [vmem:[%s221 + $0x470] sm:$0xff]
        %v365 = vld [vmem:[%s221 + $0x478] sm:$0xff]
        %v366 = vld [vmem:[%s221 + $0x480] sm:$0xff]
        %v367 = vld [vmem:[%s221 + $0x488] sm:$0xff]
        %v368 = vld [vmem:[%s221 + $0x490] sm:$0xff]
        %v369 = vld [vmem:[%s221 + $0x498] sm:$0xff]
        %v370 = vld [vmem:[%s221 + $0x4a0] sm:$0xff]
        %v371 = vld [vmem:[%s221 + $0x4a8] sm:$0xff]
        %v372 = vld [vmem:[%s221 + $0x4b0] sm:$0xff]
        %v373 = vld [vmem:[%s221 + $0x4b8] sm:$0xff]
        %v374 = vld [vmem:[%s221 + $0x4c0] sm:$0xff]
        %v375 = vld [vmem:[%s221 + $0x4c8] sm:$0xff]
        %v376 = vld [vmem:[%s221 + $0x4d0] sm:$0xff]
        %v377 = vld [vmem:[%s221 + $0x4d8] sm:$0xff]
        %v378 = vld [vmem:[%s221 + $0x4e0] sm:$0xff]
        %v379 = vld [vmem:[%s221 + $0x4e8] sm:$0xff]
        %v380 = vld [vmem:[%s221 + $0x4f0] sm:$0xff]
        %v381 = vld [vmem:[%s221 + $0x4f8] sm:$0xff]
        %v382 = vld [vmem:[%s221 + $0x500] sm:$0xff]
        %v383 = vld [vmem:[%s221 + $0x508] sm:$0xff]
        %v384 = vld [vmem:[%s221 + $0x510] sm:$0xff]
        %v385 = vld [vmem:[%s221 + $0x518] sm:$0xff]
        %v386 = vld [vmem:[%s221 + $0x520] sm:$0xff]
        %v387 = vld [vmem:[%s221 + $0x528] sm:$0xff]
        %v388 = vld [vmem:[%s221 + $0x530] sm:$0xff]
        %v389 = vld [vmem:[%s221 + $0x538] sm:$0xff]
        %v390 = vld [vmem:[%s221 + $0x540] sm:$0xff]
        %v391 = vld [vmem:[%s221 + $0x548] sm:$0xff]
        %v392 = vld [vmem:[%s221 + $0x550] sm:$0xff]
        %v393 = vld [vmem:[%s221 + $0x558] sm:$0xff]
        %v394 = vld [vmem:[%s221 + $0x560] sm:$0xff]
        %v395 = vld [vmem:[%s221 + $0x568] sm:$0xff]
        %v396 = vld [vmem:[%s221 + $0x570] sm:$0xff]
        %v397 = vld [vmem:[%s221 + $0x578] sm:$0xff]
        %v398 = vld [vmem:[%s221 + $0x580] sm:$0xff]
        %v399 = vld [vmem:[%s221 + $0x588] sm:$0xff]
        %v400 = vld [vmem:[%s221 + $0x590] sm:$0xff]
        %v401 = vld [vmem:[%s221 + $0x598] sm:$0xff]
        %v402 = vld [vmem:[%s221 + $0x5a0] sm:$0xff]
        %v403 = vld [vmem:[%s221 + $0x5a8] sm:$0xff]
        %v404 = vld [vmem:[%s221 + $0x5b0] sm:$0xff]
        %v405 = vld [vmem:[%s221 + $0x5b8] sm:$0xff]
        %v406 = vld [vmem:[%s221 + $0x5c0] sm:$0xff]
        %v407 = vld [vmem:[%s221 + $0x5c8] sm:$0xff]
        %v408 = vld [vmem:[%s221 + $0x5d0] sm:$0xff]
        %v409 = vld [vmem:[%s221 + $0x5d8] sm:$0xff]
        %v410 = vld [vmem:[%s221 + $0x5e0] sm:$0xff]
        %v411 = vld [vmem:[%s221 + $0x5e8] sm:$0xff]
        %v412 = vld [vmem:[%s221 + $0x5f0] sm:$0xff]
        %v413 = vld [vmem:[%s221 + $0x5f8] sm:$0xff]
        %v414 = vld [vmem:[%s221 + $0x600] sm:$0xff]
        %v415 = vld [vmem:[%s221 + $0x608] sm:$0xff]
        %v416 = vld [vmem:[%s221 + $0x610] sm:$0xff]
        %v417 = vld [vmem:[%s221 + $0x618] sm:$0xff]
        %v418 = vld [vmem:[%s221 + $0x620] sm:$0xff]
        %v419 = vld [vmem:[%s221 + $0x628] sm:$0xff]
        %v420 = vld [vmem:[%s221 + $0x630] sm:$0xff]
        %v421 = vld [vmem:[%s221 + $0x638] sm:$0xff]
        %v422 = vld [vmem:[%s221 + $0x640] sm:$0xff]
        %v423 = vld [vmem:[%s221 + $0x648] sm:$0xff]
        %v424 = vld [vmem:[%s221 + $0x650] sm:$0xff]
        %v425 = vld [vmem:[%s221 + $0x658] sm:$0xff]
        %v426 = vld [vmem:[%s221 + $0x660] sm:$0xff]
        %v427 = vld [vmem:[%s221 + $0x668] sm:$0xff]
        %v428 = vld [vmem:[%s221 + $0x670] sm:$0xff]
        %v429 = vld [vmem:[%s221 + $0x678] sm:$0xff]
        %v430 = vld [vmem:[%s221 + $0x680] sm:$0xff]
        %v431 = vld [vmem:[%s221 + $0x688] sm:$0xff]
        %v432 = vld [vmem:[%s221 + $0x690] sm:$0xff]
        %v433 = vld [vmem:[%s221 + $0x698] sm:$0xff]
        %v434 = vld [vmem:[%s221 + $0x6a0] sm:$0xff]
        %v435 = vld [vmem:[%s221 + $0x6a8] sm:$0xff]
        %v436 = vld [vmem:[%s221 + $0x6b0] sm:$0xff]
        %v437 = vld [vmem:[%s221 + $0x6b8] sm:$0xff]
        %v438 = vld [vmem:[%s221 + $0x6c0] sm:$0xff]
        %v439 = vld [vmem:[%s221 + $0x6c8] sm:$0xff]
        %v440 = vld [vmem:[%s221 + $0x6d0] sm:$0xff]
        %v441 = vld [vmem:[%s221 + $0x6d8] sm:$0xff]
        %v442 = vld [vmem:[%s221 + $0x6e0] sm:$0xff]
        %v443 = vld [vmem:[%s221 + $0x6e8] sm:$0xff]
        %v444 = vld [vmem:[%s221 + $0x6f0] sm:$0xff]
        %v445 = vld [vmem:[%s221 + $0x6f8] sm:$0xff]
        %v446 = vld [vmem:[%s221 + $0x700] sm:$0xff]
        %v447 = vld [vmem:[%s221 + $0x708] sm:$0xff]
        %v448 = vld [vmem:[%s221 + $0x710] sm:$0xff]
        %v449 = vld [vmem:[%s221 + $0x718] sm:$0xff]
        %v450 = vld [vmem:[%s221 + $0x720] sm:$0xff]
        %v451 = vld [vmem:[%s221 + $0x728] sm:$0xff]
        %v452 = vld [vmem:[%s221 + $0x730] sm:$0xff]
        %v453 = vld [vmem:[%s221 + $0x738] sm:$0xff]
        %v454 = vld [vmem:[%s221 + $0x740] sm:$0xff]
        %v455 = vld [vmem:[%s221 + $0x748] sm:$0xff]
        %v456 = vld [vmem:[%s221 + $0x750] sm:$0xff]
        %v457 = vld [vmem:[%s221 + $0x758] sm:$0xff]
        %v458 = vld [vmem:[%s221 + $0x760] sm:$0xff]
        %v459 = vld [vmem:[%s221 + $0x768] sm:$0xff]
        %v460 = vld [vmem:[%s221 + $0x770] sm:$0xff]
        %v461 = vld [vmem:[%s221 + $0x778] sm:$0xff]
        %v462 = vld [vmem:[%s221 + $0x780] sm:$0xff]
        %v463 = vld [vmem:[%s221 + $0x788] sm:$0xff]
        %v464 = vld [vmem:[%s221 + $0x790] sm:$0xff]
        %v465 = vld [vmem:[%s221 + $0x798] sm:$0xff]
        %v466 = vld [vmem:[%s221 + $0x7a0] sm:$0xff]
        %v467 = vld [vmem:[%s221 + $0x7a8] sm:$0xff]
        %v468 = vld [vmem:[%s221 + $0x7b0] sm:$0xff]
        %v469 = vld [vmem:[%s221 + $0x7b8] sm:$0xff]
        %v470 = vld [vmem:[%s221 + $0x7c0] sm:$0xff]
        %v471 = vld [vmem:[%s221 + $0x7c8] sm:$0xff]
        %v472 = vld [vmem:[%s221 + $0x7d0] sm:$0xff]
        %v473 = vld [vmem:[%s221 + $0x7d8] sm:$0xff]
        %v474 = vld [vmem:[%s221 + $0x7e0] sm:$0xff]
        %v475 = vld [vmem:[%s221 + $0x7e8] sm:$0xff]
        %v476 = vld [vmem:[%s221 + $0x7f0] sm:$0xff]
        %v477 = vld [vmem:[%s221 + $0x7f8] sm:$0xff]
        %v478 = vld [vmem:[%s1] sm:$0xff]
        %v479 = vld [vmem:[%s1 + $0x8] sm:$0xff]
        %v480 = vld [vmem:[%s1 + $0x10] sm:$0xff]
        %v481 = vld [vmem:[%s1 + $0x18] sm:$0xff]
        %v482 = vld [vmem:[%s2] sm:$0x1]
        %v484 = vperm.slane %v482, 0
        %vm486 = vcmask 261120
        %v488 = vsel %vm486, %v222, 0
        %v491 = vsel %vm486, %v223, 0
        %v494 = vsel %vm486, %v224, 0
        %v497 = vsel %vm486, %v225, 0
        %v500 = vsel %vm486, %v226, 0
        %v503 = vsel %vm486, %v227, 0
        %v506 = vsel %vm486, %v228, 0
        %v509 = vsel %vm486, %v229, 0
        %v512 = vsel %vm486, %v230, 0
        %v515 = vsel %vm486, %v231, 0
        %v518 = vsel %vm486, %v232, 0
        %v521 = vsel %vm486, %v233, 0
        %v524 = vsel %vm486, %v234, 0
        %v527 = vsel %vm486, %v235, 0
        %v530 = vsel %vm486, %v236, 0
        %v533 = vsel %vm486, %v237, 0
        %v536 = vsel %vm486, %v238, 0
        %v539 = vsel %vm486, %v239, 0
        %v542 = vsel %vm486, %v240, 0
        %v545 = vsel %vm486, %v241, 0
        %v548 = vsel %vm486, %v242, 0
        %v551 = vsel %vm486, %v243, 0
        %v554 = vsel %vm486, %v244, 0
        %v557 = vsel %vm486, %v245, 0
        %v560 = vsel %vm486, %v246, 0
        %v563 = vsel %vm486, %v247, 0
        %v566 = vsel %vm486, %v248, 0
        %v569 = vsel %vm486, %v249, 0
        %v572 = vsel %vm486, %v250, 0
        %v575 = vsel %vm486, %v251, 0
        %v578 = vsel %vm486, %v252, 0
        %v581 = vsel %vm486, %v253, 0
        %v584 = vsel %vm486, %v254, 0
        %v587 = vsel %vm486, %v255, 0
        %v590 = vsel %vm486, %v256, 0
        %v593 = vsel %vm486, %v257, 0
        %v596 = vsel %vm486, %v258, 0
        %v599 = vsel %vm486, %v259, 0
        %v602 = vsel %vm486, %v260, 0
        %v605 = vsel %vm486, %v261, 0
        %v608 = vsel %vm486, %v262, 0
        %v611 = vsel %vm486, %v263, 0
        %v614 = vsel %vm486, %v264, 0
        %v617 = vsel %vm486, %v265, 0
        %v620 = vsel %vm486, %v266, 0
        %v623 = vsel %vm486, %v267, 0
        %v626 = vsel %vm486, %v268, 0
        %v629 = vsel %vm486, %v269, 0
        %v632 = vsel %vm486, %v270, 0
        %v635 = vsel %vm486, %v271, 0
        %v638 = vsel %vm486, %v272, 0
        %v641 = vsel %vm486, %v273, 0
        %v644 = vsel %vm486, %v274, 0
        %v647 = vsel %vm486, %v275, 0
        %v650 = vsel %vm486, %v276, 0
        %v653 = vsel %vm486, %v277, 0
        %v656 = vsel %vm486, %v278, 0
        %v659 = vsel %vm486, %v279, 0
        %v662 = vsel %vm486, %v280, 0
        %v665 = vsel %vm486, %v281, 0
        %v668 = vsel %vm486, %v282, 0
        %v671 = vsel %vm486, %v283, 0
        %v674 = vsel %vm486, %v284, 0
        %v677 = vsel %vm486, %v285, 0
        %v680 = vsel %vm486, %v286, 0
        %v683 = vsel %vm486, %v287, 0
        %v686 = vsel %vm486, %v288, 0
        %v689 = vsel %vm486, %v289, 0
        %v692 = vsel %vm486, %v290, 0
        %v695 = vsel %vm486, %v291, 0
        %v698 = vsel %vm486, %v292, 0
        %v701 = vsel %vm486, %v293, 0
        %v704 = vsel %vm486, %v294, 0
        %v707 = vsel %vm486, %v295, 0
        %v710 = vsel %vm486, %v296, 0
        %v713 = vsel %vm486, %v297, 0
        %v716 = vsel %vm486, %v298, 0
        %v719 = vsel %vm486, %v299, 0
        %v722 = vsel %vm486, %v300, 0
        %v725 = vsel %vm486, %v301, 0
        %v728 = vsel %vm486, %v302, 0
        %v731 = vsel %vm486, %v303, 0
        %v734 = vsel %vm486, %v304, 0
        %v737 = vsel %vm486, %v305, 0
        %v740 = vsel %vm486, %v306, 0
        %v743 = vsel %vm486, %v307, 0
        %v746 = vsel %vm486, %v308, 0
        %v749 = vsel %vm486, %v309, 0
        %v752 = vsel %vm486, %v310, 0
        %v755 = vsel %vm486, %v311, 0
        %v758 = vsel %vm486, %v312, 0
        %v761 = vsel %vm486, %v313, 0
        %v764 = vsel %vm486, %v314, 0
        %v767 = vsel %vm486, %v315, 0
        %v770 = vsel %vm486, %v316, 0
        %v773 = vsel %vm486, %v317, 0
        %v776 = vsel %vm486, %v318, 0
        %v779 = vsel %vm486, %v319, 0
        %v782 = vsel %vm486, %v320, 0
        %v785 = vsel %vm486, %v321, 0
        %v788 = vsel %vm486, %v322, 0
        %v791 = vsel %vm486, %v323, 0
        %v794 = vsel %vm486, %v324, 0
        %v797 = vsel %vm486, %v325, 0
        %v800 = vsel %vm486, %v326, 0
        %v803 = vsel %vm486, %v327, 0
        %v806 = vsel %vm486, %v328, 0
        %v809 = vsel %vm486, %v329, 0
        %v812 = vsel %vm486, %v330, 0
        %v815 = vsel %vm486, %v331, 0
        %v818 = vsel %vm486, %v332, 0
        %v821 = vsel %vm486, %v333, 0
        %v824 = vsel %vm486, %v334, 0
        %v827 = vsel %vm486, %v335, 0
        %v830 = vsel %vm486, %v336, 0
        %v833 = vsel %vm486, %v337, 0
        %v836 = vsel %vm486, %v338, 0
        %v839 = vsel %vm486, %v339, 0
        %v842 = vsel %vm486, %v340, 0
        %v845 = vsel %vm486, %v341, 0
        %v848 = vsel %vm486, %v342, 0
        %v851 = vsel %vm486, %v343, 0
        %v854 = vsel %vm486, %v344, 0
        %v857 = vsel %vm486, %v345, 0
        %v860 = vsel %vm486, %v346, 0
        %v863 = vsel %vm486, %v347, 0
        %v866 = vsel %vm486, %v348, 0
        %v869 = vsel %vm486, %v349, 0
        %v872 = vsel %vm486, %v350, 0
        %v875 = vsel %vm486, %v351, 0
        %v878 = vsel %vm486, %v352, 0
        %v881 = vsel %vm486, %v353, 0
        %v884 = vsel %vm486, %v354, 0
        %v887 = vsel %vm486, %v355, 0
        %v890 = vsel %vm486, %v356, 0
        %v893 = vsel %vm486, %v357, 0
        %v896 = vsel %vm486, %v358, 0
        %v899 = vsel %vm486, %v359, 0
        %v902 = vsel %vm486, %v360, 0
        %v905 = vsel %vm486, %v361, 0
        %v908 = vsel %vm486, %v362, 0
        %v911 = vsel %vm486, %v363, 0
        %v914 = vsel %vm486, %v364, 0
        %v917 = vsel %vm486, %v365, 0
        %v920 = vsel %vm486, %v366, 0
        %v923 = vsel %vm486, %v367, 0
        %v926 = vsel %vm486, %v368, 0
        %v929 = vsel %vm486, %v369, 0
        %v932 = vsel %vm486, %v370, 0
        %v935 = vsel %vm486, %v371, 0
        %v938 = vsel %vm486, %v372, 0
        %v941 = vsel %vm486, %v373, 0
        %v944 = vsel %vm486, %v374, 0
        %v947 = vsel %vm486, %v375, 0
        %v950 = vsel %vm486, %v376, 0
        %v953 = vsel %vm486, %v377, 0
        %v956 = vsel %vm486, %v378, 0
        %v959 = vsel %vm486, %v379, 0
        %v962 = vsel %vm486, %v380, 0
        %v965 = vsel %vm486, %v381, 0
        %v968 = vsel %vm486, %v382, 0
        %v971 = vsel %vm486, %v383, 0
        %v974 = vsel %vm486, %v384, 0
        %v977 = vsel %vm486, %v385, 0
        %v980 = vsel %vm486, %v386, 0
        %v983 = vsel %vm486, %v387, 0
        %v986 = vsel %vm486, %v388, 0
        %v989 = vsel %vm486, %v389, 0
        %v992 = vsel %vm486, %v390, 0
        %v995 = vsel %vm486, %v391, 0
        %v998 = vsel %vm486, %v392, 0
        %v1001 = vsel %vm486, %v393, 0
        %v1004 = vsel %vm486, %v394, 0
        %v1007 = vsel %vm486, %v395, 0
        %v1010 = vsel %vm486, %v396, 0
        %v1013 = vsel %vm486, %v397, 0
        %v1016 = vsel %vm486, %v398, 0
        %v1019 = vsel %vm486, %v399, 0
        %v1022 = vsel %vm486, %v400, 0
        %v1025 = vsel %vm486, %v401, 0
        %v1028 = vsel %vm486, %v402, 0
        %v1031 = vsel %vm486, %v403, 0
        %v1034 = vsel %vm486, %v404, 0
        %v1037 = vsel %vm486, %v405, 0
        %v1040 = vsel %vm486, %v406, 0
        %v1043 = vsel %vm486, %v407, 0
        %v1046 = vsel %vm486, %v408, 0
        %v1049 = vsel %vm486, %v409, 0
        %v1052 = vsel %vm486, %v410, 0
        %v1055 = vsel %vm486, %v411, 0
        %v1058 = vsel %vm486, %v412, 0
        %v1061 = vsel %vm486, %v413, 0
        %v1064 = vsel %vm486, %v414, 0
        %v1067 = vsel %vm486, %v415, 0
        %v1070 = vsel %vm486, %v416, 0
        %v1073 = vsel %vm486, %v417, 0
        %v1076 = vsel %vm486, %v418, 0
        %v1079 = vsel %vm486, %v419, 0
        %v1082 = vsel %vm486, %v420, 0
        %v1085 = vsel %vm486, %v421, 0
        %v1088 = vsel %vm486, %v422, 0
        %v1091 = vsel %vm486, %v423, 0
        %v1094 = vsel %vm486, %v424, 0
        %v1097 = vsel %vm486, %v425, 0
        %v1100 = vsel %vm486, %v426, 0
        %v1103 = vsel %vm486, %v427, 0
        %v1106 = vsel %vm486, %v428, 0
        %v1109 = vsel %vm486, %v429, 0
        %v1112 = vsel %vm486, %v430, 0
        %v1115 = vsel %vm486, %v431, 0
        %v1118 = vsel %vm486, %v432, 0
        %v1121 = vsel %vm486, %v433, 0
        %v1124 = vsel %vm486, %v434, 0
        %v1127 = vsel %vm486, %v435, 0
        %v1130 = vsel %vm486, %v436, 0
        %v1133 = vsel %vm486, %v437, 0
        %v1136 = vsel %vm486, %v438, 0
        %v1139 = vsel %vm486, %v439, 0
        %v1142 = vsel %vm486, %v440, 0
        %v1145 = vsel %vm486, %v441, 0
        %v1148 = vsel %vm486, %v442, 0
        %v1151 = vsel %vm486, %v443, 0
        %v1154 = vsel %vm486, %v444, 0
        %v1157 = vsel %vm486, %v445, 0
        %v1160 = vsel %vm486, %v446, 0
        %v1163 = vsel %vm486, %v447, 0
        %v1166 = vsel %vm486, %v448, 0
        %v1169 = vsel %vm486, %v449, 0
        %v1172 = vsel %vm486, %v450, 0
        %v1175 = vsel %vm486, %v451, 0
        %v1178 = vsel %vm486, %v452, 0
        %v1181 = vsel %vm486, %v453, 0
        %v1184 = vsel %vm486, %v454, 0
        %v1187 = vsel %vm486, %v455, 0
        %v1190 = vsel %vm486, %v456, 0
        %v1193 = vsel %vm486, %v457, 0
        %v1196 = vsel %vm486, %v458, 0
        %v1199 = vsel %vm486, %v459, 0
        %v1202 = vsel %vm486, %v460, 0
        %v1205 = vsel %vm486, %v461, 0
        %v1208 = vsel %vm486, %v462, 0
        %v1211 = vsel %vm486, %v463, 0
        %v1214 = vsel %vm486, %v464, 0
        %v1217 = vsel %vm486, %v465, 0
        %v1220 = vsel %vm486, %v466, 0
        %v1223 = vsel %vm486, %v467, 0
        %v1226 = vsel %vm486, %v468, 0
        %v1229 = vsel %vm486, %v469, 0
        %v1232 = vsel %vm486, %v470, 0
        %v1235 = vsel %vm486, %v471, 0
        %v1238 = vsel %vm486, %v472, 0
        %v1241 = vsel %vm486, %v473, 0
        %v1244 = vsel %vm486, %v474, 0
        %v1247 = vsel %vm486, %v475, 0
        %v1250 = vsel %vm486, %v476, 0
        %v1253 = vsel %vm486, %v477, 0
        %1255 = vmatpush.msra.mxu0 0.0
        %1256 = vmatpush.msra.mxu0 0.0
        %1257 = vmatpush.msra.mxu0 0.0
        %1258 = vmatpush.msra.mxu0 0.0
        %1259 = vmatpush.msra.mxu0 0.0
        %1260 = vmatpush.msra.mxu0 0.0
        %1261 = vmatpush.msra.mxu0 0.0
        %1262 = vmatpush.msra.mxu0 0.0
        %1263 = vmatpush.msra.mxu0 0.0
        %1264 = vmatpush.msra.mxu0 0.0
        %1265 = vmatpush.msra.mxu0 0.0
        %1266 = vmatpush.msra.mxu0 0.0
        %1267 = vmatpush.msra.mxu0 %v481
        %1268 = vmatpush.msra.mxu0 %v480
        %1269 = vmatpush.msra.mxu0 %v479
        %1270 = vmatpush.msra.mxu0 %v478
        %1271 = vmatmul.f32.gmra.mxu0 %v488
        %v1272 = vpop.f32.mrf.mxu0
        %v1273 = vadd.f32 %v484, %v1272
        %1274 = vmatmul.f32.gmra.mxu0 %v491
        %v1275 = vpop.f32.mrf.mxu0
        %v1276 = vadd.f32 %v484, %v1275
        %1277 = vmatmul.f32.gmra.mxu0 %v494
        %v1278 = vpop.f32.mrf.mxu0
        %v1279 = vadd.f32 %v484, %v1278
        %1280 = vmatmul.f32.gmra.mxu0 %v497
        %v1281 = vpop.f32.mrf.mxu0
        %v1282 = vadd.f32 %v484, %v1281
        %1283 = vmatmul.f32.gmra.mxu0 %v500
        %v1284 = vpop.f32.mrf.mxu0
        %v1285 = vadd.f32 %v484, %v1284
        %1286 = vmatmul.f32.gmra.mxu0 %v503
        %v1287 = vpop.f32.mrf.mxu0
        %v1288 = vadd.f32 %v484, %v1287
        %1289 = vmatmul.f32.gmra.mxu0 %v506
        %v1290 = vpop.f32.mrf.mxu0
        %v1291 = vadd.f32 %v484, %v1290
        %1292 = vmatmul.f32.gmra.mxu0 %v509
        %v1293 = vpop.f32.mrf.mxu0
        %v1294 = vadd.f32 %v484, %v1293
        %1295 = vmatmul.f32.gmra.mxu0 %v512
        %v1296 = vpop.f32.mrf.mxu0
        %v1297 = vadd.f32 %v484, %v1296
        %1298 = vmatmul.f32.gmra.mxu0 %v515
        %v1299 = vpop.f32.mrf.mxu0
        %v1300 = vadd.f32 %v484, %v1299
        %1301 = vmatmul.f32.gmra.mxu0 %v518
        %v1302 = vpop.f32.mrf.mxu0
        %v1303 = vadd.f32 %v484, %v1302
        %1304 = vmatmul.f32.gmra.mxu0 %v521
        %v1305 = vpop.f32.mrf.mxu0
        %v1306 = vadd.f32 %v484, %v1305
        %1307 = vmatmul.f32.gmra.mxu0 %v524
        %v1308 = vpop.f32.mrf.mxu0
        %v1309 = vadd.f32 %v484, %v1308
        %1310 = vmatmul.f32.gmra.mxu0 %v527
        %v1311 = vpop.f32.mrf.mxu0
        %v1312 = vadd.f32 %v484, %v1311
        %1313 = vmatmul.f32.gmra.mxu0 %v530
        %v1314 = vpop.f32.mrf.mxu0
        %v1315 = vadd.f32 %v484, %v1314
        %1316 = vmatmul.f32.gmra.mxu0 %v533
        %v1317 = vpop.f32.mrf.mxu0
        %v1318 = vadd.f32 %v484, %v1317
        %1319 = vmatmul.f32.gmra.mxu0 %v536
        %v1320 = vpop.f32.mrf.mxu0
        %v1321 = vadd.f32 %v484, %v1320
        %1322 = vmatmul.f32.gmra.mxu0 %v539
        %v1323 = vpop.f32.mrf.mxu0
        %v1324 = vadd.f32 %v484, %v1323
        %1325 = vmatmul.f32.gmra.mxu0 %v542
        %v1326 = vpop.f32.mrf.mxu0
        %v1327 = vadd.f32 %v484, %v1326
        %1328 = vmatmul.f32.gmra.mxu0 %v545
        %v1329 = vpop.f32.mrf.mxu0
        %v1330 = vadd.f32 %v484, %v1329
        %1331 = vmatmul.f32.gmra.mxu0 %v548
        %v1332 = vpop.f32.mrf.mxu0
        %v1333 = vadd.f32 %v484, %v1332
        %1334 = vmatmul.f32.gmra.mxu0 %v551
        %v1335 = vpop.f32.mrf.mxu0
        %v1336 = vadd.f32 %v484, %v1335
        %1337 = vmatmul.f32.gmra.mxu0 %v554
        %v1338 = vpop.f32.mrf.mxu0
        %v1339 = vadd.f32 %v484, %v1338
        %1340 = vmatmul.f32.gmra.mxu0 %v557
        %v1341 = vpop.f32.mrf.mxu0
        %v1342 = vadd.f32 %v484, %v1341
        %1343 = vmatmul.f32.gmra.mxu0 %v560
        %v1344 = vpop.f32.mrf.mxu0
        %v1345 = vadd.f32 %v484, %v1344
        %1346 = vmatmul.f32.gmra.mxu0 %v563
        %v1347 = vpop.f32.mrf.mxu0
        %v1348 = vadd.f32 %v484, %v1347
        %1349 = vmatmul.f32.gmra.mxu0 %v566
        %v1350 = vpop.f32.mrf.mxu0
        %v1351 = vadd.f32 %v484, %v1350
        %1352 = vmatmul.f32.gmra.mxu0 %v569
        %v1353 = vpop.f32.mrf.mxu0
        %v1354 = vadd.f32 %v484, %v1353
        %1355 = vmatmul.f32.gmra.mxu0 %v572
        %v1356 = vpop.f32.mrf.mxu0
        %v1357 = vadd.f32 %v484, %v1356
        %1358 = vmatmul.f32.gmra.mxu0 %v575
        %v1359 = vpop.f32.mrf.mxu0
        %v1360 = vadd.f32 %v484, %v1359
        %1361 = vmatmul.f32.gmra.mxu0 %v578
        %v1362 = vpop.f32.mrf.mxu0
        %v1363 = vadd.f32 %v484, %v1362
        %1364 = vmatmul.f32.gmra.mxu0 %v581
        %v1365 = vpop.f32.mrf.mxu0
        %v1366 = vadd.f32 %v484, %v1365
        %1367 = vmatmul.f32.gmra.mxu0 %v584
        %v1368 = vpop.f32.mrf.mxu0
        %v1369 = vadd.f32 %v484, %v1368
        %1370 = vmatmul.f32.gmra.mxu0 %v587
        %v1371 = vpop.f32.mrf.mxu0
        %v1372 = vadd.f32 %v484, %v1371
        %1373 = vmatmul.f32.gmra.mxu0 %v590
        %v1374 = vpop.f32.mrf.mxu0
        %v1375 = vadd.f32 %v484, %v1374
        %1376 = vmatmul.f32.gmra.mxu0 %v593
        %v1377 = vpop.f32.mrf.mxu0
        %v1378 = vadd.f32 %v484, %v1377
        %1379 = vmatmul.f32.gmra.mxu0 %v596
        %v1380 = vpop.f32.mrf.mxu0
        %v1381 = vadd.f32 %v484, %v1380
        %1382 = vmatmul.f32.gmra.mxu0 %v599
        %v1383 = vpop.f32.mrf.mxu0
        %v1384 = vadd.f32 %v484, %v1383
        %1385 = vmatmul.f32.gmra.mxu0 %v602
        %v1386 = vpop.f32.mrf.mxu0
        %v1387 = vadd.f32 %v484, %v1386
        %1388 = vmatmul.f32.gmra.mxu0 %v605
        %v1389 = vpop.f32.mrf.mxu0
        %v1390 = vadd.f32 %v484, %v1389
        %1391 = vmatmul.f32.gmra.mxu0 %v608
        %v1392 = vpop.f32.mrf.mxu0
        %v1393 = vadd.f32 %v484, %v1392
        %1394 = vmatmul.f32.gmra.mxu0 %v611
        %v1395 = vpop.f32.mrf.mxu0
        %v1396 = vadd.f32 %v484, %v1395
        %1397 = vmatmul.f32.gmra.mxu0 %v614
        %v1398 = vpop.f32.mrf.mxu0
        %v1399 = vadd.f32 %v484, %v1398
        %1400 = vmatmul.f32.gmra.mxu0 %v617
        %v1401 = vpop.f32.mrf.mxu0
        %v1402 = vadd.f32 %v484, %v1401
        %1403 = vmatmul.f32.gmra.mxu0 %v620
        %v1404 = vpop.f32.mrf.mxu0
        %v1405 = vadd.f32 %v484, %v1404
        %1406 = vmatmul.f32.gmra.mxu0 %v623
        %v1407 = vpop.f32.mrf.mxu0
        %v1408 = vadd.f32 %v484, %v1407
        %1409 = vmatmul.f32.gmra.mxu0 %v626
        %v1410 = vpop.f32.mrf.mxu0
        %v1411 = vadd.f32 %v484, %v1410
        %1412 = vmatmul.f32.gmra.mxu0 %v629
        %v1413 = vpop.f32.mrf.mxu0
        %v1414 = vadd.f32 %v484, %v1413
        %1415 = vmatmul.f32.gmra.mxu0 %v632
        %v1416 = vpop.f32.mrf.mxu0
        %v1417 = vadd.f32 %v484, %v1416
        %1418 = vmatmul.f32.gmra.mxu0 %v635
        %v1419 = vpop.f32.mrf.mxu0
        %v1420 = vadd.f32 %v484, %v1419
        %1421 = vmatmul.f32.gmra.mxu0 %v638
        %v1422 = vpop.f32.mrf.mxu0
        %v1423 = vadd.f32 %v484, %v1422
        %1424 = vmatmul.f32.gmra.mxu0 %v641
        %v1425 = vpop.f32.mrf.mxu0
        %v1426 = vadd.f32 %v484, %v1425
        %1427 = vmatmul.f32.gmra.mxu0 %v644
        %v1428 = vpop.f32.mrf.mxu0
        %v1429 = vadd.f32 %v484, %v1428
        %1430 = vmatmul.f32.gmra.mxu0 %v647
        %v1431 = vpop.f32.mrf.mxu0
        %v1432 = vadd.f32 %v484, %v1431
        %1433 = vmatmul.f32.gmra.mxu0 %v650
        %v1434 = vpop.f32.mrf.mxu0
        %v1435 = vadd.f32 %v484, %v1434
        %1436 = vmatmul.f32.gmra.mxu0 %v653
        %v1437 = vpop.f32.mrf.mxu0
        %v1438 = vadd.f32 %v484, %v1437
        %1439 = vmatmul.f32.gmra.mxu0 %v656
        %v1440 = vpop.f32.mrf.mxu0
        %v1441 = vadd.f32 %v484, %v1440
        %1442 = vmatmul.f32.gmra.mxu0 %v659
        %v1443 = vpop.f32.mrf.mxu0
        %v1444 = vadd.f32 %v484, %v1443
        %1445 = vmatmul.f32.gmra.mxu0 %v662
        %v1446 = vpop.f32.mrf.mxu0
        %v1447 = vadd.f32 %v484, %v1446
        %1448 = vmatmul.f32.gmra.mxu0 %v665
        %v1449 = vpop.f32.mrf.mxu0
        %v1450 = vadd.f32 %v484, %v1449
        %1451 = vmatmul.f32.gmra.mxu0 %v668
        %v1452 = vpop.f32.mrf.mxu0
        %v1453 = vadd.f32 %v484, %v1452
        %1454 = vmatmul.f32.gmra.mxu0 %v671
        %v1455 = vpop.f32.mrf.mxu0
        %v1456 = vadd.f32 %v484, %v1455
        %1457 = vmatmul.f32.gmra.mxu0 %v674
        %v1458 = vpop.f32.mrf.mxu0
        %v1459 = vadd.f32 %v484, %v1458
        %1460 = vmatmul.f32.gmra.mxu0 %v677
        %v1461 = vpop.f32.mrf.mxu0
        %v1462 = vadd.f32 %v484, %v1461
        %1463 = vmatmul.f32.gmra.mxu0 %v680
        %v1464 = vpop.f32.mrf.mxu0
        %v1465 = vadd.f32 %v484, %v1464
        %1466 = vmatmul.f32.gmra.mxu0 %v683
        %v1467 = vpop.f32.mrf.mxu0
        %v1468 = vadd.f32 %v484, %v1467
        %1469 = vmatmul.f32.gmra.mxu0 %v686
        %v1470 = vpop.f32.mrf.mxu0
        %v1471 = vadd.f32 %v484, %v1470
        %1472 = vmatmul.f32.gmra.mxu0 %v689
        %v1473 = vpop.f32.mrf.mxu0
        %v1474 = vadd.f32 %v484, %v1473
        %1475 = vmatmul.f32.gmra.mxu0 %v692
        %v1476 = vpop.f32.mrf.mxu0
        %v1477 = vadd.f32 %v484, %v1476
        %1478 = vmatmul.f32.gmra.mxu0 %v695
        %v1479 = vpop.f32.mrf.mxu0
        %v1480 = vadd.f32 %v484, %v1479
        %1481 = vmatmul.f32.gmra.mxu0 %v698
        %v1482 = vpop.f32.mrf.mxu0
        %v1483 = vadd.f32 %v484, %v1482
        %1484 = vmatmul.f32.gmra.mxu0 %v701
        %v1485 = vpop.f32.mrf.mxu0
        %v1486 = vadd.f32 %v484, %v1485
        %1487 = vmatmul.f32.gmra.mxu0 %v704
        %v1488 = vpop.f32.mrf.mxu0
        %v1489 = vadd.f32 %v484, %v1488
        %1490 = vmatmul.f32.gmra.mxu0 %v707
        %v1491 = vpop.f32.mrf.mxu0
        %v1492 = vadd.f32 %v484, %v1491
        %1493 = vmatmul.f32.gmra.mxu0 %v710
        %v1494 = vpop.f32.mrf.mxu0
        %v1495 = vadd.f32 %v484, %v1494
        %1496 = vmatmul.f32.gmra.mxu0 %v713
        %v1497 = vpop.f32.mrf.mxu0
        %v1498 = vadd.f32 %v484, %v1497
        %1499 = vmatmul.f32.gmra.mxu0 %v716
        %v1500 = vpop.f32.mrf.mxu0
        %v1501 = vadd.f32 %v484, %v1500
        %1502 = vmatmul.f32.gmra.mxu0 %v719
        %v1503 = vpop.f32.mrf.mxu0
        %v1504 = vadd.f32 %v484, %v1503
        %1505 = vmatmul.f32.gmra.mxu0 %v722
        %v1506 = vpop.f32.mrf.mxu0
        %v1507 = vadd.f32 %v484, %v1506
        %1508 = vmatmul.f32.gmra.mxu0 %v725
        %v1509 = vpop.f32.mrf.mxu0
        %v1510 = vadd.f32 %v484, %v1509
        %1511 = vmatmul.f32.gmra.mxu0 %v728
        %v1512 = vpop.f32.mrf.mxu0
        %v1513 = vadd.f32 %v484, %v1512
        %1514 = vmatmul.f32.gmra.mxu0 %v731
        %v1515 = vpop.f32.mrf.mxu0
        %v1516 = vadd.f32 %v484, %v1515
        %1517 = vmatmul.f32.gmra.mxu0 %v734
        %v1518 = vpop.f32.mrf.mxu0
        %v1519 = vadd.f32 %v484, %v1518
        %1520 = vmatmul.f32.gmra.mxu0 %v737
        %v1521 = vpop.f32.mrf.mxu0
        %v1522 = vadd.f32 %v484, %v1521
        %1523 = vmatmul.f32.gmra.mxu0 %v740
        %v1524 = vpop.f32.mrf.mxu0
        %v1525 = vadd.f32 %v484, %v1524
        %1526 = vmatmul.f32.gmra.mxu0 %v743
        %v1527 = vpop.f32.mrf.mxu0
        %v1528 = vadd.f32 %v484, %v1527
        %1529 = vmatmul.f32.gmra.mxu0 %v746
        %v1530 = vpop.f32.mrf.mxu0
        %v1531 = vadd.f32 %v484, %v1530
        %1532 = vmatmul.f32.gmra.mxu0 %v749
        %v1533 = vpop.f32.mrf.mxu0
        %v1534 = vadd.f32 %v484, %v1533
        %1535 = vmatmul.f32.gmra.mxu0 %v752
        %v1536 = vpop.f32.mrf.mxu0
        %v1537 = vadd.f32 %v484, %v1536
        %1538 = vmatmul.f32.gmra.mxu0 %v755
        %v1539 = vpop.f32.mrf.mxu0
        %v1540 = vadd.f32 %v484, %v1539
        %1541 = vmatmul.f32.gmra.mxu0 %v758
        %v1542 = vpop.f32.mrf.mxu0
        %v1543 = vadd.f32 %v484, %v1542
        %1544 = vmatmul.f32.gmra.mxu0 %v761
        %v1545 = vpop.f32.mrf.mxu0
        %v1546 = vadd.f32 %v484, %v1545
        %1547 = vmatmul.f32.gmra.mxu0 %v764
        %v1548 = vpop.f32.mrf.mxu0
        %v1549 = vadd.f32 %v484, %v1548
        %1550 = vmatmul.f32.gmra.mxu0 %v767
        %v1551 = vpop.f32.mrf.mxu0
        %v1552 = vadd.f32 %v484, %v1551
        %1553 = vmatmul.f32.gmra.mxu0 %v770
        %v1554 = vpop.f32.mrf.mxu0
        %v1555 = vadd.f32 %v484, %v1554
        %1556 = vmatmul.f32.gmra.mxu0 %v773
        %v1557 = vpop.f32.mrf.mxu0
        %v1558 = vadd.f32 %v484, %v1557
        %1559 = vmatmul.f32.gmra.mxu0 %v776
        %v1560 = vpop.f32.mrf.mxu0
        %v1561 = vadd.f32 %v484, %v1560
        %1562 = vmatmul.f32.gmra.mxu0 %v779
        %v1563 = vpop.f32.mrf.mxu0
        %v1564 = vadd.f32 %v484, %v1563
        %1565 = vmatmul.f32.gmra.mxu0 %v782
        %v1566 = vpop.f32.mrf.mxu0
        %v1567 = vadd.f32 %v484, %v1566
        %1568 = vmatmul.f32.gmra.mxu0 %v785
        %v1569 = vpop.f32.mrf.mxu0
        %v1570 = vadd.f32 %v484, %v1569
        %1571 = vmatmul.f32.gmra.mxu0 %v788
        %v1572 = vpop.f32.mrf.mxu0
        %v1573 = vadd.f32 %v484, %v1572
        %1574 = vmatmul.f32.gmra.mxu0 %v791
        %v1575 = vpop.f32.mrf.mxu0
        %v1576 = vadd.f32 %v484, %v1575
        %1577 = vmatmul.f32.gmra.mxu0 %v794
        %v1578 = vpop.f32.mrf.mxu0
        %v1579 = vadd.f32 %v484, %v1578
        %1580 = vmatmul.f32.gmra.mxu0 %v797
        %v1581 = vpop.f32.mrf.mxu0
        %v1582 = vadd.f32 %v484, %v1581
        %1583 = vmatmul.f32.gmra.mxu0 %v800
        %v1584 = vpop.f32.mrf.mxu0
        %v1585 = vadd.f32 %v484, %v1584
        %1586 = vmatmul.f32.gmra.mxu0 %v803
        %v1587 = vpop.f32.mrf.mxu0
        %v1588 = vadd.f32 %v484, %v1587
        %1589 = vmatmul.f32.gmra.mxu0 %v806
        %v1590 = vpop.f32.mrf.mxu0
        %v1591 = vadd.f32 %v484, %v1590
        %1592 = vmatmul.f32.gmra.mxu0 %v809
        %v1593 = vpop.f32.mrf.mxu0
        %v1594 = vadd.f32 %v484, %v1593
        %1595 = vmatmul.f32.gmra.mxu0 %v812
        %v1596 = vpop.f32.mrf.mxu0
        %v1597 = vadd.f32 %v484, %v1596
        %1598 = vmatmul.f32.gmra.mxu0 %v815
        %v1599 = vpop.f32.mrf.mxu0
        %v1600 = vadd.f32 %v484, %v1599
        %1601 = vmatmul.f32.gmra.mxu0 %v818
        %v1602 = vpop.f32.mrf.mxu0
        %v1603 = vadd.f32 %v484, %v1602
        %1604 = vmatmul.f32.gmra.mxu0 %v821
        %v1605 = vpop.f32.mrf.mxu0
        %v1606 = vadd.f32 %v484, %v1605
        %1607 = vmatmul.f32.gmra.mxu0 %v824
        %v1608 = vpop.f32.mrf.mxu0
        %v1609 = vadd.f32 %v484, %v1608
        %1610 = vmatmul.f32.gmra.mxu0 %v827
        %v1611 = vpop.f32.mrf.mxu0
        %v1612 = vadd.f32 %v484, %v1611
        %1613 = vmatmul.f32.gmra.mxu0 %v830
        %v1614 = vpop.f32.mrf.mxu0
        %v1615 = vadd.f32 %v484, %v1614
        %1616 = vmatmul.f32.gmra.mxu0 %v833
        %v1617 = vpop.f32.mrf.mxu0
        %v1618 = vadd.f32 %v484, %v1617
        %1619 = vmatmul.f32.gmra.mxu0 %v836
        %v1620 = vpop.f32.mrf.mxu0
        %v1621 = vadd.f32 %v484, %v1620
        %1622 = vmatmul.f32.gmra.mxu0 %v839
        %v1623 = vpop.f32.mrf.mxu0
        %v1624 = vadd.f32 %v484, %v1623
        %1625 = vmatmul.f32.gmra.mxu0 %v842
        %v1626 = vpop.f32.mrf.mxu0
        %v1627 = vadd.f32 %v484, %v1626
        %1628 = vmatmul.f32.gmra.mxu0 %v845
        %v1629 = vpop.f32.mrf.mxu0
        %v1630 = vadd.f32 %v484, %v1629
        %1631 = vmatmul.f32.gmra.mxu0 %v848
        %v1632 = vpop.f32.mrf.mxu0
        %v1633 = vadd.f32 %v484, %v1632
        %1634 = vmatmul.f32.gmra.mxu0 %v851
        %v1635 = vpop.f32.mrf.mxu0
        %v1636 = vadd.f32 %v484, %v1635
        %1637 = vmatmul.f32.gmra.mxu0 %v854
        %v1638 = vpop.f32.mrf.mxu0
        %v1639 = vadd.f32 %v484, %v1638
        %1640 = vmatmul.f32.gmra.mxu0 %v857
        %v1641 = vpop.f32.mrf.mxu0
        %v1642 = vadd.f32 %v484, %v1641
        %1643 = vmatmul.f32.gmra.mxu0 %v860
        %v1644 = vpop.f32.mrf.mxu0
        %v1645 = vadd.f32 %v484, %v1644
        %1646 = vmatmul.f32.gmra.mxu0 %v863
        %v1647 = vpop.f32.mrf.mxu0
        %v1648 = vadd.f32 %v484, %v1647
        %1649 = vmatmul.f32.gmra.mxu0 %v866
        %v1650 = vpop.f32.mrf.mxu0
        %v1651 = vadd.f32 %v484, %v1650
        %1652 = vmatmul.f32.gmra.mxu0 %v869
        %v1653 = vpop.f32.mrf.mxu0
        %v1654 = vadd.f32 %v484, %v1653
        %1655 = vmatmul.f32.gmra.mxu0 %v872
        %v1656 = vpop.f32.mrf.mxu0
        %v1657 = vadd.f32 %v484, %v1656
        %1658 = vmatmul.f32.gmra.mxu0 %v875
        %v1659 = vpop.f32.mrf.mxu0
        %v1660 = vadd.f32 %v484, %v1659
        %1661 = vmatmul.f32.gmra.mxu0 %v878
        %v1662 = vpop.f32.mrf.mxu0
        %v1663 = vadd.f32 %v484, %v1662
        %1664 = vmatmul.f32.gmra.mxu0 %v881
        %v1665 = vpop.f32.mrf.mxu0
        %v1666 = vadd.f32 %v484, %v1665
        %1667 = vmatmul.f32.gmra.mxu0 %v884
        %v1668 = vpop.f32.mrf.mxu0
        %v1669 = vadd.f32 %v484, %v1668
        %1670 = vmatmul.f32.gmra.mxu0 %v887
        %v1671 = vpop.f32.mrf.mxu0
        %v1672 = vadd.f32 %v484, %v1671
        %1673 = vmatmul.f32.gmra.mxu0 %v890
        %v1674 = vpop.f32.mrf.mxu0
        %v1675 = vadd.f32 %v484, %v1674
        %1676 = vmatmul.f32.gmra.mxu0 %v893
        %v1677 = vpop.f32.mrf.mxu0
        %v1678 = vadd.f32 %v484, %v1677
        %1679 = vmatmul.f32.gmra.mxu0 %v896
        %v1680 = vpop.f32.mrf.mxu0
        %v1681 = vadd.f32 %v484, %v1680
        %1682 = vmatmul.f32.gmra.mxu0 %v899
        %v1683 = vpop.f32.mrf.mxu0
        %v1684 = vadd.f32 %v484, %v1683
        %1685 = vmatmul.f32.gmra.mxu0 %v902
        %v1686 = vpop.f32.mrf.mxu0
        %v1687 = vadd.f32 %v484, %v1686
        %1688 = vmatmul.f32.gmra.mxu0 %v905
        %v1689 = vpop.f32.mrf.mxu0
        %v1690 = vadd.f32 %v484, %v1689
        %1691 = vmatmul.f32.gmra.mxu0 %v908
        %v1692 = vpop.f32.mrf.mxu0
        %v1693 = vadd.f32 %v484, %v1692
        %1694 = vmatmul.f32.gmra.mxu0 %v911
        %v1695 = vpop.f32.mrf.mxu0
        %v1696 = vadd.f32 %v484, %v1695
        %1697 = vmatmul.f32.gmra.mxu0 %v914
        %v1698 = vpop.f32.mrf.mxu0
        %v1699 = vadd.f32 %v484, %v1698
        %1700 = vmatmul.f32.gmra.mxu0 %v917
        %v1701 = vpop.f32.mrf.mxu0
        %v1702 = vadd.f32 %v484, %v1701
        %1703 = vmatmul.f32.gmra.mxu0 %v920
        %v1704 = vpop.f32.mrf.mxu0
        %v1705 = vadd.f32 %v484, %v1704
        %1706 = vmatmul.f32.gmra.mxu0 %v923
        %v1707 = vpop.f32.mrf.mxu0
        %v1708 = vadd.f32 %v484, %v1707
        %1709 = vmatmul.f32.gmra.mxu0 %v926
        %v1710 = vpop.f32.mrf.mxu0
        %v1711 = vadd.f32 %v484, %v1710
        %1712 = vmatmul.f32.gmra.mxu0 %v929
        %v1713 = vpop.f32.mrf.mxu0
        %v1714 = vadd.f32 %v484, %v1713
        %1715 = vmatmul.f32.gmra.mxu0 %v932
        %v1716 = vpop.f32.mrf.mxu0
        %v1717 = vadd.f32 %v484, %v1716
        %1718 = vmatmul.f32.gmra.mxu0 %v935
        %v1719 = vpop.f32.mrf.mxu0
        %v1720 = vadd.f32 %v484, %v1719
        %1721 = vmatmul.f32.gmra.mxu0 %v938
        %v1722 = vpop.f32.mrf.mxu0
        %v1723 = vadd.f32 %v484, %v1722
        %1724 = vmatmul.f32.gmra.mxu0 %v941
        %v1725 = vpop.f32.mrf.mxu0
        %v1726 = vadd.f32 %v484, %v1725
        %1727 = vmatmul.f32.gmra.mxu0 %v944
        %v1728 = vpop.f32.mrf.mxu0
        %v1729 = vadd.f32 %v484, %v1728
        %1730 = vmatmul.f32.gmra.mxu0 %v947
        %v1731 = vpop.f32.mrf.mxu0
        %v1732 = vadd.f32 %v484, %v1731
        %1733 = vmatmul.f32.gmra.mxu0 %v950
        %v1734 = vpop.f32.mrf.mxu0
        %v1735 = vadd.f32 %v484, %v1734
        %1736 = vmatmul.f32.gmra.mxu0 %v953
        %v1737 = vpop.f32.mrf.mxu0
        %v1738 = vadd.f32 %v484, %v1737
        %1739 = vmatmul.f32.gmra.mxu0 %v956
        %v1740 = vpop.f32.mrf.mxu0
        %v1741 = vadd.f32 %v484, %v1740
        %1742 = vmatmul.f32.gmra.mxu0 %v959
        %v1743 = vpop.f32.mrf.mxu0
        %v1744 = vadd.f32 %v484, %v1743
        %1745 = vmatmul.f32.gmra.mxu0 %v962
        %v1746 = vpop.f32.mrf.mxu0
        %v1747 = vadd.f32 %v484, %v1746
        %1748 = vmatmul.f32.gmra.mxu0 %v965
        %v1749 = vpop.f32.mrf.mxu0
        %v1750 = vadd.f32 %v484, %v1749
        %1751 = vmatmul.f32.gmra.mxu0 %v968
        %v1752 = vpop.f32.mrf.mxu0
        %v1753 = vadd.f32 %v484, %v1752
        %1754 = vmatmul.f32.gmra.mxu0 %v971
        %v1755 = vpop.f32.mrf.mxu0
        %v1756 = vadd.f32 %v484, %v1755
        %1757 = vmatmul.f32.gmra.mxu0 %v974
        %v1758 = vpop.f32.mrf.mxu0
        %v1759 = vadd.f32 %v484, %v1758
        %1760 = vmatmul.f32.gmra.mxu0 %v977
        %v1761 = vpop.f32.mrf.mxu0
        %v1762 = vadd.f32 %v484, %v1761
        %1763 = vmatmul.f32.gmra.mxu0 %v980
        %v1764 = vpop.f32.mrf.mxu0
        %v1765 = vadd.f32 %v484, %v1764
        %1766 = vmatmul.f32.gmra.mxu0 %v983
        %v1767 = vpop.f32.mrf.mxu0
        %v1768 = vadd.f32 %v484, %v1767
        %1769 = vmatmul.f32.gmra.mxu0 %v986
        %v1770 = vpop.f32.mrf.mxu0
        %v1771 = vadd.f32 %v484, %v1770
        %1772 = vmatmul.f32.gmra.mxu0 %v989
        %v1773 = vpop.f32.mrf.mxu0
        %v1774 = vadd.f32 %v484, %v1773
        %1775 = vmatmul.f32.gmra.mxu0 %v992
        %v1776 = vpop.f32.mrf.mxu0
        %v1777 = vadd.f32 %v484, %v1776
        %1778 = vmatmul.f32.gmra.mxu0 %v995
        %v1779 = vpop.f32.mrf.mxu0
        %v1780 = vadd.f32 %v484, %v1779
        %1781 = vmatmul.f32.gmra.mxu0 %v998
        %v1782 = vpop.f32.mrf.mxu0
        %v1783 = vadd.f32 %v484, %v1782
        %1784 = vmatmul.f32.gmra.mxu0 %v1001
        %v1785 = vpop.f32.mrf.mxu0
        %v1786 = vadd.f32 %v484, %v1785
        %1787 = vmatmul.f32.gmra.mxu0 %v1004
        %v1788 = vpop.f32.mrf.mxu0
        %v1789 = vadd.f32 %v484, %v1788
        %1790 = vmatmul.f32.gmra.mxu0 %v1007
        %v1791 = vpop.f32.mrf.mxu0
        %v1792 = vadd.f32 %v484, %v1791
        %1793 = vmatmul.f32.gmra.mxu0 %v1010
        %v1794 = vpop.f32.mrf.mxu0
        %v1795 = vadd.f32 %v484, %v1794
        %1796 = vmatmul.f32.gmra.mxu0 %v1013
        %v1797 = vpop.f32.mrf.mxu0
        %v1798 = vadd.f32 %v484, %v1797
        %1799 = vmatmul.f32.gmra.mxu0 %v1016
        %v1800 = vpop.f32.mrf.mxu0
        %v1801 = vadd.f32 %v484, %v1800
        %1802 = vmatmul.f32.gmra.mxu0 %v1019
        %v1803 = vpop.f32.mrf.mxu0
        %v1804 = vadd.f32 %v484, %v1803
        %1805 = vmatmul.f32.gmra.mxu0 %v1022
        %v1806 = vpop.f32.mrf.mxu0
        %v1807 = vadd.f32 %v484, %v1806
        %1808 = vmatmul.f32.gmra.mxu0 %v1025
        %v1809 = vpop.f32.mrf.mxu0
        %v1810 = vadd.f32 %v484, %v1809
        %1811 = vmatmul.f32.gmra.mxu0 %v1028
        %v1812 = vpop.f32.mrf.mxu0
        %v1813 = vadd.f32 %v484, %v1812
        %1814 = vmatmul.f32.gmra.mxu0 %v1031
        %v1815 = vpop.f32.mrf.mxu0
        %v1816 = vadd.f32 %v484, %v1815
        %1817 = vmatmul.f32.gmra.mxu0 %v1034
        %v1818 = vpop.f32.mrf.mxu0
        %v1819 = vadd.f32 %v484, %v1818
        %1820 = vmatmul.f32.gmra.mxu0 %v1037
        %v1821 = vpop.f32.mrf.mxu0
        %v1822 = vadd.f32 %v484, %v1821
        %1823 = vmatmul.f32.gmra.mxu0 %v1040
        %v1824 = vpop.f32.mrf.mxu0
        %v1825 = vadd.f32 %v484, %v1824
        %1826 = vmatmul.f32.gmra.mxu0 %v1043
        %v1827 = vpop.f32.mrf.mxu0
        %v1828 = vadd.f32 %v484, %v1827
        %1829 = vmatmul.f32.gmra.mxu0 %v1046
        %v1830 = vpop.f32.mrf.mxu0
        %v1831 = vadd.f32 %v484, %v1830
        %1832 = vmatmul.f32.gmra.mxu0 %v1049
        %v1833 = vpop.f32.mrf.mxu0
        %v1834 = vadd.f32 %v484, %v1833
        %1835 = vmatmul.f32.gmra.mxu0 %v1052
        %v1836 = vpop.f32.mrf.mxu0
        %v1837 = vadd.f32 %v484, %v1836
        %1838 = vmatmul.f32.gmra.mxu0 %v1055
        %v1839 = vpop.f32.mrf.mxu0
        %v1840 = vadd.f32 %v484, %v1839
        %1841 = vmatmul.f32.gmra.mxu0 %v1058
        %v1842 = vpop.f32.mrf.mxu0
        %v1843 = vadd.f32 %v484, %v1842
        %1844 = vmatmul.f32.gmra.mxu0 %v1061
        %v1845 = vpop.f32.mrf.mxu0
        %v1846 = vadd.f32 %v484, %v1845
        %1847 = vmatmul.f32.gmra.mxu0 %v1064
        %v1848 = vpop.f32.mrf.mxu0
        %v1849 = vadd.f32 %v484, %v1848
        %1850 = vmatmul.f32.gmra.mxu0 %v1067
        %v1851 = vpop.f32.mrf.mxu0
        %v1852 = vadd.f32 %v484, %v1851
        %1853 = vmatmul.f32.gmra.mxu0 %v1070
        %v1854 = vpop.f32.mrf.mxu0
        %v1855 = vadd.f32 %v484, %v1854
        %1856 = vmatmul.f32.gmra.mxu0 %v1073
        %v1857 = vpop.f32.mrf.mxu0
        %v1858 = vadd.f32 %v484, %v1857
        %1859 = vmatmul.f32.gmra.mxu0 %v1076
        %v1860 = vpop.f32.mrf.mxu0
        %v1861 = vadd.f32 %v484, %v1860
        %1862 = vmatmul.f32.gmra.mxu0 %v1079
        %v1863 = vpop.f32.mrf.mxu0
        %v1864 = vadd.f32 %v484, %v1863
        %1865 = vmatmul.f32.gmra.mxu0 %v1082
        %v1866 = vpop.f32.mrf.mxu0
        %v1867 = vadd.f32 %v484, %v1866
        %1868 = vmatmul.f32.gmra.mxu0 %v1085
        %v1869 = vpop.f32.mrf.mxu0
        %v1870 = vadd.f32 %v484, %v1869
        %1871 = vmatmul.f32.gmra.mxu0 %v1088
        %v1872 = vpop.f32.mrf.mxu0
        %v1873 = vadd.f32 %v484, %v1872
        %1874 = vmatmul.f32.gmra.mxu0 %v1091
        %v1875 = vpop.f32.mrf.mxu0
        %v1876 = vadd.f32 %v484, %v1875
        %1877 = vmatmul.f32.gmra.mxu0 %v1094
        %v1878 = vpop.f32.mrf.mxu0
        %v1879 = vadd.f32 %v484, %v1878
        %1880 = vmatmul.f32.gmra.mxu0 %v1097
        %v1881 = vpop.f32.mrf.mxu0
        %v1882 = vadd.f32 %v484, %v1881
        %1883 = vmatmul.f32.gmra.mxu0 %v1100
        %v1884 = vpop.f32.mrf.mxu0
        %v1885 = vadd.f32 %v484, %v1884
        %1886 = vmatmul.f32.gmra.mxu0 %v1103
        %v1887 = vpop.f32.mrf.mxu0
        %v1888 = vadd.f32 %v484, %v1887
        %1889 = vmatmul.f32.gmra.mxu0 %v1106
        %v1890 = vpop.f32.mrf.mxu0
        %v1891 = vadd.f32 %v484, %v1890
        %1892 = vmatmul.f32.gmra.mxu0 %v1109
        %v1893 = vpop.f32.mrf.mxu0
        %v1894 = vadd.f32 %v484, %v1893
        %1895 = vmatmul.f32.gmra.mxu0 %v1112
        %v1896 = vpop.f32.mrf.mxu0
        %v1897 = vadd.f32 %v484, %v1896
        %1898 = vmatmul.f32.gmra.mxu0 %v1115
        %v1899 = vpop.f32.mrf.mxu0
        %v1900 = vadd.f32 %v484, %v1899
        %1901 = vmatmul.f32.gmra.mxu0 %v1118
        %v1902 = vpop.f32.mrf.mxu0
        %v1903 = vadd.f32 %v484, %v1902
        %1904 = vmatmul.f32.gmra.mxu0 %v1121
        %v1905 = vpop.f32.mrf.mxu0
        %v1906 = vadd.f32 %v484, %v1905
        %1907 = vmatmul.f32.gmra.mxu0 %v1124
        %v1908 = vpop.f32.mrf.mxu0
        %v1909 = vadd.f32 %v484, %v1908
        %1910 = vmatmul.f32.gmra.mxu0 %v1127
        %v1911 = vpop.f32.mrf.mxu0
        %v1912 = vadd.f32 %v484, %v1911
        %1913 = vmatmul.f32.gmra.mxu0 %v1130
        %v1914 = vpop.f32.mrf.mxu0
        %v1915 = vadd.f32 %v484, %v1914
        %1916 = vmatmul.f32.gmra.mxu0 %v1133
        %v1917 = vpop.f32.mrf.mxu0
        %v1918 = vadd.f32 %v484, %v1917
        %1919 = vmatmul.f32.gmra.mxu0 %v1136
        %v1920 = vpop.f32.mrf.mxu0
        %v1921 = vadd.f32 %v484, %v1920
        %1922 = vmatmul.f32.gmra.mxu0 %v1139
        %v1923 = vpop.f32.mrf.mxu0
        %v1924 = vadd.f32 %v484, %v1923
        %1925 = vmatmul.f32.gmra.mxu0 %v1142
        %v1926 = vpop.f32.mrf.mxu0
        %v1927 = vadd.f32 %v484, %v1926
        %1928 = vmatmul.f32.gmra.mxu0 %v1145
        %v1929 = vpop.f32.mrf.mxu0
        %v1930 = vadd.f32 %v484, %v1929
        %1931 = vmatmul.f32.gmra.mxu0 %v1148
        %v1932 = vpop.f32.mrf.mxu0
        %v1933 = vadd.f32 %v484, %v1932
        %1934 = vmatmul.f32.gmra.mxu0 %v1151
        %v1935 = vpop.f32.mrf.mxu0
        %v1936 = vadd.f32 %v484, %v1935
        %1937 = vmatmul.f32.gmra.mxu0 %v1154
        %v1938 = vpop.f32.mrf.mxu0
        %v1939 = vadd.f32 %v484, %v1938
        %1940 = vmatmul.f32.gmra.mxu0 %v1157
        %v1941 = vpop.f32.mrf.mxu0
        %v1942 = vadd.f32 %v484, %v1941
        %1943 = vmatmul.f32.gmra.mxu0 %v1160
        %v1944 = vpop.f32.mrf.mxu0
        %v1945 = vadd.f32 %v484, %v1944
        %1946 = vmatmul.f32.gmra.mxu0 %v1163
        %v1947 = vpop.f32.mrf.mxu0
        %v1948 = vadd.f32 %v484, %v1947
        %1949 = vmatmul.f32.gmra.mxu0 %v1166
        %v1950 = vpop.f32.mrf.mxu0
        %v1951 = vadd.f32 %v484, %v1950
        %1952 = vmatmul.f32.gmra.mxu0 %v1169
        %v1953 = vpop.f32.mrf.mxu0
        %v1954 = vadd.f32 %v484, %v1953
        %1955 = vmatmul.f32.gmra.mxu0 %v1172
        %v1956 = vpop.f32.mrf.mxu0
        %v1957 = vadd.f32 %v484, %v1956
        %1958 = vmatmul.f32.gmra.mxu0 %v1175
        %v1959 = vpop.f32.mrf.mxu0
        %v1960 = vadd.f32 %v484, %v1959
        %1961 = vmatmul.f32.gmra.mxu0 %v1178
        %v1962 = vpop.f32.mrf.mxu0
        %v1963 = vadd.f32 %v484, %v1962
        %1964 = vmatmul.f32.gmra.mxu0 %v1181
        %v1965 = vpop.f32.mrf.mxu0
        %v1966 = vadd.f32 %v484, %v1965
        %1967 = vmatmul.f32.gmra.mxu0 %v1184
        %v1968 = vpop.f32.mrf.mxu0
        %v1969 = vadd.f32 %v484, %v1968
        %1970 = vmatmul.f32.gmra.mxu0 %v1187
        %v1971 = vpop.f32.mrf.mxu0
        %v1972 = vadd.f32 %v484, %v1971
        %1973 = vmatmul.f32.gmra.mxu0 %v1190
        %v1974 = vpop.f32.mrf.mxu0
        %v1975 = vadd.f32 %v484, %v1974
        %1976 = vmatmul.f32.gmra.mxu0 %v1193
        %v1977 = vpop.f32.mrf.mxu0
        %v1978 = vadd.f32 %v484, %v1977
        %1979 = vmatmul.f32.gmra.mxu0 %v1196
        %v1980 = vpop.f32.mrf.mxu0
        %v1981 = vadd.f32 %v484, %v1980
        %1982 = vmatmul.f32.gmra.mxu0 %v1199
        %v1983 = vpop.f32.mrf.mxu0
        %v1984 = vadd.f32 %v484, %v1983
        %1985 = vmatmul.f32.gmra.mxu0 %v1202
        %v1986 = vpop.f32.mrf.mxu0
        %v1987 = vadd.f32 %v484, %v1986
        %1988 = vmatmul.f32.gmra.mxu0 %v1205
        %v1989 = vpop.f32.mrf.mxu0
        %v1990 = vadd.f32 %v484, %v1989
        %1991 = vmatmul.f32.gmra.mxu0 %v1208
        %v1992 = vpop.f32.mrf.mxu0
        %v1993 = vadd.f32 %v484, %v1992
        %1994 = vmatmul.f32.gmra.mxu0 %v1211
        %v1995 = vpop.f32.mrf.mxu0
        %v1996 = vadd.f32 %v484, %v1995
        %1997 = vmatmul.f32.gmra.mxu0 %v1214
        %v1998 = vpop.f32.mrf.mxu0
        %v1999 = vadd.f32 %v484, %v1998
        %2000 = vmatmul.f32.gmra.mxu0 %v1217
        %v2001 = vpop.f32.mrf.mxu0
        %v2002 = vadd.f32 %v484, %v2001
        %2003 = vmatmul.f32.gmra.mxu0 %v1220
        %v2004 = vpop.f32.mrf.mxu0
        %v2005 = vadd.f32 %v484, %v2004
        %2006 = vmatmul.f32.gmra.mxu0 %v1223
        %v2007 = vpop.f32.mrf.mxu0
        %v2008 = vadd.f32 %v484, %v2007
        %2009 = vmatmul.f32.gmra.mxu0 %v1226
        %v2010 = vpop.f32.mrf.mxu0
        %v2011 = vadd.f32 %v484, %v2010
        %2012 = vmatmul.f32.gmra.mxu0 %v1229
        %v2013 = vpop.f32.mrf.mxu0
        %v2014 = vadd.f32 %v484, %v2013
        %2015 = vmatmul.f32.gmra.mxu0 %v1232
        %v2016 = vpop.f32.mrf.mxu0
        %v2017 = vadd.f32 %v484, %v2016
        %2018 = vmatmul.f32.gmra.mxu0 %v1235
        %v2019 = vpop.f32.mrf.mxu0
        %v2020 = vadd.f32 %v484, %v2019
        %2021 = vmatmul.f32.gmra.mxu0 %v1238
        %v2022 = vpop.f32.mrf.mxu0
        %v2023 = vadd.f32 %v484, %v2022
        %2024 = vmatmul.f32.gmra.mxu0 %v1241
        %v2025 = vpop.f32.mrf.mxu0
        %v2026 = vadd.f32 %v484, %v2025
        %2027 = vmatmul.f32.gmra.mxu0 %v1244
        %v2028 = vpop.f32.mrf.mxu0
        %v2029 = vadd.f32 %v484, %v2028
        %2030 = vmatmul.f32.gmra.mxu0 %v1247
        %v2031 = vpop.f32.mrf.mxu0
        %v2032 = vadd.f32 %v484, %v2031
        %2033 = vmatmul.f32.gmra.mxu0 %v1250
        %v2034 = vpop.f32.mrf.mxu0
        %v2035 = vadd.f32 %v484, %v2034
        %2036 = vmatmul.f32.gmra.mxu0 %v1253
        %v2037 = vpop.f32.mrf.mxu0
        %v2038 = vadd.f32 %v484, %v2037
        %2039 = vdwg.mxu0
        %v2040 = vmax.f32 %v1273, 0.0
        %v2041 = vmax.f32 %v1276, 0.0
        %v2042 = vmax.f32 %v1279, 0.0
        %v2043 = vmax.f32 %v1282, 0.0
        %v2044 = vmax.f32 %v1285, 0.0
        %v2045 = vmax.f32 %v1288, 0.0
        %v2046 = vmax.f32 %v1291, 0.0
        %v2047 = vmax.f32 %v1294, 0.0
        %v2048 = vmax.f32 %v1297, 0.0
        %v2049 = vmax.f32 %v1300, 0.0
        %v2050 = vmax.f32 %v1303, 0.0
        %v2051 = vmax.f32 %v1306, 0.0
        %v2052 = vmax.f32 %v1309, 0.0
        %v2053 = vmax.f32 %v1312, 0.0
        %v2054 = vmax.f32 %v1315, 0.0
        %v2055 = vmax.f32 %v1318, 0.0
        %v2056 = vmax.f32 %v1321, 0.0
        %v2057 = vmax.f32 %v1324, 0.0
        %v2058 = vmax.f32 %v1327, 0.0
        %v2059 = vmax.f32 %v1330, 0.0
        %v2060 = vmax.f32 %v1333, 0.0
        %v2061 = vmax.f32 %v1336, 0.0
        %v2062 = vmax.f32 %v1339, 0.0
        %v2063 = vmax.f32 %v1342, 0.0
        %v2064 = vmax.f32 %v1345, 0.0
        %v2065 = vmax.f32 %v1348, 0.0
        %v2066 = vmax.f32 %v1351, 0.0
        %v2067 = vmax.f32 %v1354, 0.0
        %v2068 = vmax.f32 %v1357, 0.0
        %v2069 = vmax.f32 %v1360, 0.0
        %v2070 = vmax.f32 %v1363, 0.0
        %v2071 = vmax.f32 %v1366, 0.0
        %v2072 = vmax.f32 %v1369, 0.0
        %v2073 = vmax.f32 %v1372, 0.0
        %v2074 = vmax.f32 %v1375, 0.0
        %v2075 = vmax.f32 %v1378, 0.0
        %v2076 = vmax.f32 %v1381, 0.0
        %v2077 = vmax.f32 %v1384, 0.0
        %v2078 = vmax.f32 %v1387, 0.0
        %v2079 = vmax.f32 %v1390, 0.0
        %v2080 = vmax.f32 %v1393, 0.0
        %v2081 = vmax.f32 %v1396, 0.0
        %v2082 = vmax.f32 %v1399, 0.0
        %v2083 = vmax.f32 %v1402, 0.0
        %v2084 = vmax.f32 %v1405, 0.0
        %v2085 = vmax.f32 %v1408, 0.0
        %v2086 = vmax.f32 %v1411, 0.0
        %v2087 = vmax.f32 %v1414, 0.0
        %v2088 = vmax.f32 %v1417, 0.0
        %v2089 = vmax.f32 %v1420, 0.0
        %v2090 = vmax.f32 %v1423, 0.0
        %v2091 = vmax.f32 %v1426, 0.0
        %v2092 = vmax.f32 %v1429, 0.0
        %v2093 = vmax.f32 %v1432, 0.0
        %v2094 = vmax.f32 %v1435, 0.0
        %v2095 = vmax.f32 %v1438, 0.0
        %v2096 = vmax.f32 %v1441, 0.0
        %v2097 = vmax.f32 %v1444, 0.0
        %v2098 = vmax.f32 %v1447, 0.0
        %v2099 = vmax.f32 %v1450, 0.0
        %v2100 = vmax.f32 %v1453, 0.0
        %v2101 = vmax.f32 %v1456, 0.0
        %v2102 = vmax.f32 %v1459, 0.0
        %v2103 = vmax.f32 %v1462, 0.0
        %v2104 = vmax.f32 %v1465, 0.0
        %v2105 = vmax.f32 %v1468, 0.0
        %v2106 = vmax.f32 %v1471, 0.0
        %v2107 = vmax.f32 %v1474, 0.0
        %v2108 = vmax.f32 %v1477, 0.0
        %v2109 = vmax.f32 %v1480, 0.0
        %v2110 = vmax.f32 %v1483, 0.0
        %v2111 = vmax.f32 %v1486, 0.0
        %v2112 = vmax.f32 %v1489, 0.0
        %v2113 = vmax.f32 %v1492, 0.0
        %v2114 = vmax.f32 %v1495, 0.0
        %v2115 = vmax.f32 %v1498, 0.0
        %v2116 = vmax.f32 %v1501, 0.0
        %v2117 = vmax.f32 %v1504, 0.0
        %v2118 = vmax.f32 %v1507, 0.0
        %v2119 = vmax.f32 %v1510, 0.0
        %v2120 = vmax.f32 %v1513, 0.0
        %v2121 = vmax.f32 %v1516, 0.0
        %v2122 = vmax.f32 %v1519, 0.0
        %v2123 = vmax.f32 %v1522, 0.0
        %v2124 = vmax.f32 %v1525, 0.0
        %v2125 = vmax.f32 %v1528, 0.0
        %v2126 = vmax.f32 %v1531, 0.0
        %v2127 = vmax.f32 %v1534, 0.0
        %v2128 = vmax.f32 %v1537, 0.0
        %v2129 = vmax.f32 %v1540, 0.0
        %v2130 = vmax.f32 %v1543, 0.0
        %v2131 = vmax.f32 %v1546, 0.0
        %v2132 = vmax.f32 %v1549, 0.0
        %v2133 = vmax.f32 %v1552, 0.0
        %v2134 = vmax.f32 %v1555, 0.0
        %v2135 = vmax.f32 %v1558, 0.0
        %v2136 = vmax.f32 %v1561, 0.0
        %v2137 = vmax.f32 %v1564, 0.0
        %v2138 = vmax.f32 %v1567, 0.0
        %v2139 = vmax.f32 %v1570, 0.0
        %v2140 = vmax.f32 %v1573, 0.0
        %v2141 = vmax.f32 %v1576, 0.0
        %v2142 = vmax.f32 %v1579, 0.0
        %v2143 = vmax.f32 %v1582, 0.0
        %v2144 = vmax.f32 %v1585, 0.0
        %v2145 = vmax.f32 %v1588, 0.0
        %v2146 = vmax.f32 %v1591, 0.0
        %v2147 = vmax.f32 %v1594, 0.0
        %v2148 = vmax.f32 %v1597, 0.0
        %v2149 = vmax.f32 %v1600, 0.0
        %v2150 = vmax.f32 %v1603, 0.0
        %v2151 = vmax.f32 %v1606, 0.0
        %v2152 = vmax.f32 %v1609, 0.0
        %v2153 = vmax.f32 %v1612, 0.0
        %v2154 = vmax.f32 %v1615, 0.0
        %v2155 = vmax.f32 %v1618, 0.0
        %v2156 = vmax.f32 %v1621, 0.0
        %v2157 = vmax.f32 %v1624, 0.0
        %v2158 = vmax.f32 %v1627, 0.0
        %v2159 = vmax.f32 %v1630, 0.0
        %v2160 = vmax.f32 %v1633, 0.0
        %v2161 = vmax.f32 %v1636, 0.0
        %v2162 = vmax.f32 %v1639, 0.0
        %v2163 = vmax.f32 %v1642, 0.0
        %v2164 = vmax.f32 %v1645, 0.0
        %v2165 = vmax.f32 %v1648, 0.0
        %v2166 = vmax.f32 %v1651, 0.0
        %v2167 = vmax.f32 %v1654, 0.0
        %v2168 = vmax.f32 %v1657, 0.0
        %v2169 = vmax.f32 %v1660, 0.0
        %v2170 = vmax.f32 %v1663, 0.0
        %v2171 = vmax.f32 %v1666, 0.0
        %v2172 = vmax.f32 %v1669, 0.0
        %v2173 = vmax.f32 %v1672, 0.0
        %v2174 = vmax.f32 %v1675, 0.0
        %v2175 = vmax.f32 %v1678, 0.0
        %v2176 = vmax.f32 %v1681, 0.0
        %v2177 = vmax.f32 %v1684, 0.0
        %v2178 = vmax.f32 %v1687, 0.0
        %v2179 = vmax.f32 %v1690, 0.0
        %v2180 = vmax.f32 %v1693, 0.0
        %v2181 = vmax.f32 %v1696, 0.0
        %v2182 = vmax.f32 %v1699, 0.0
        %v2183 = vmax.f32 %v1702, 0.0
        %v2184 = vmax.f32 %v1705, 0.0
        %v2185 = vmax.f32 %v1708, 0.0
        %v2186 = vmax.f32 %v1711, 0.0
        %v2187 = vmax.f32 %v1714, 0.0
        %v2188 = vmax.f32 %v1717, 0.0
        %v2189 = vmax.f32 %v1720, 0.0
        %v2190 = vmax.f32 %v1723, 0.0
        %v2191 = vmax.f32 %v1726, 0.0
        %v2192 = vmax.f32 %v1729, 0.0
        %v2193 = vmax.f32 %v1732, 0.0
        %v2194 = vmax.f32 %v1735, 0.0
        %v2195 = vmax.f32 %v1738, 0.0
        %v2196 = vmax.f32 %v1741, 0.0
        %v2197 = vmax.f32 %v1744, 0.0
        %v2198 = vmax.f32 %v1747, 0.0
        %v2199 = vmax.f32 %v1750, 0.0
        %v2200 = vmax.f32 %v1753, 0.0
        %v2201 = vmax.f32 %v1756, 0.0
        %v2202 = vmax.f32 %v1759, 0.0
        %v2203 = vmax.f32 %v1762, 0.0
        %v2204 = vmax.f32 %v1765, 0.0
        %v2205 = vmax.f32 %v1768, 0.0
        %v2206 = vmax.f32 %v1771, 0.0
        %v2207 = vmax.f32 %v1774, 0.0
        %v2208 = vmax.f32 %v1777, 0.0
        %v2209 = vmax.f32 %v1780, 0.0
        %v2210 = vmax.f32 %v1783, 0.0
        %v2211 = vmax.f32 %v1786, 0.0
        %v2212 = vmax.f32 %v1789, 0.0
        %v2213 = vmax.f32 %v1792, 0.0
        %v2214 = vmax.f32 %v1795, 0.0
        %v2215 = vmax.f32 %v1798, 0.0
        %v2216 = vmax.f32 %v1801, 0.0
        %v2217 = vmax.f32 %v1804, 0.0
        %v2218 = vmax.f32 %v1807, 0.0
        %v2219 = vmax.f32 %v1810, 0.0
        %v2220 = vmax.f32 %v1813, 0.0
        %v2221 = vmax.f32 %v1816, 0.0
        %v2222 = vmax.f32 %v1819, 0.0
        %v2223 = vmax.f32 %v1822, 0.0
        %v2224 = vmax.f32 %v1825, 0.0
        %v2225 = vmax.f32 %v1828, 0.0
        %v2226 = vmax.f32 %v1831, 0.0
        %v2227 = vmax.f32 %v1834, 0.0
        %v2228 = vmax.f32 %v1837, 0.0
        %v2229 = vmax.f32 %v1840, 0.0
        %v2230 = vmax.f32 %v1843, 0.0
        %v2231 = vmax.f32 %v1846, 0.0
        %v2232 = vmax.f32 %v1849, 0.0
        %v2233 = vmax.f32 %v1852, 0.0
        %v2234 = vmax.f32 %v1855, 0.0
        %v2235 = vmax.f32 %v1858, 0.0
        %v2236 = vmax.f32 %v1861, 0.0
        %v2237 = vmax.f32 %v1864, 0.0
        %v2238 = vmax.f32 %v1867, 0.0
        %v2239 = vmax.f32 %v1870, 0.0
        %v2240 = vmax.f32 %v1873, 0.0
        %v2241 = vmax.f32 %v1876, 0.0
        %v2242 = vmax.f32 %v1879, 0.0
        %v2243 = vmax.f32 %v1882, 0.0
        %v2244 = vmax.f32 %v1885, 0.0
        %v2245 = vmax.f32 %v1888, 0.0
        %v2246 = vmax.f32 %v1891, 0.0
        %v2247 = vmax.f32 %v1894, 0.0
        %v2248 = vmax.f32 %v1897, 0.0
        %v2249 = vmax.f32 %v1900, 0.0
        %v2250 = vmax.f32 %v1903, 0.0
        %v2251 = vmax.f32 %v1906, 0.0
        %v2252 = vmax.f32 %v1909, 0.0
        %v2253 = vmax.f32 %v1912, 0.0
        %v2254 = vmax.f32 %v1915, 0.0
        %v2255 = vmax.f32 %v1918, 0.0
        %v2256 = vmax.f32 %v1921, 0.0
        %v2257 = vmax.f32 %v1924, 0.0
        %v2258 = vmax.f32 %v1927, 0.0
        %v2259 = vmax.f32 %v1930, 0.0
        %v2260 = vmax.f32 %v1933, 0.0
        %v2261 = vmax.f32 %v1936, 0.0
        %v2262 = vmax.f32 %v1939, 0.0
        %v2263 = vmax.f32 %v1942, 0.0
        %v2264 = vmax.f32 %v1945, 0.0
        %v2265 = vmax.f32 %v1948, 0.0
        %v2266 = vmax.f32 %v1951, 0.0
        %v2267 = vmax.f32 %v1954, 0.0
        %v2268 = vmax.f32 %v1957, 0.0
        %v2269 = vmax.f32 %v1960, 0.0
        %v2270 = vmax.f32 %v1963, 0.0
        %v2271 = vmax.f32 %v1966, 0.0
        %v2272 = vmax.f32 %v1969, 0.0
        %v2273 = vmax.f32 %v1972, 0.0
        %v2274 = vmax.f32 %v1975, 0.0
        %v2275 = vmax.f32 %v1978, 0.0
        %v2276 = vmax.f32 %v1981, 0.0
        %v2277 = vmax.f32 %v1984, 0.0
        %v2278 = vmax.f32 %v1987, 0.0
        %v2279 = vmax.f32 %v1990, 0.0
        %v2280 = vmax.f32 %v1993, 0.0
        %v2281 = vmax.f32 %v1996, 0.0
        %v2282 = vmax.f32 %v1999, 0.0
        %v2283 = vmax.f32 %v2002, 0.0
        %v2284 = vmax.f32 %v2005, 0.0
        %v2285 = vmax.f32 %v2008, 0.0
        %v2286 = vmax.f32 %v2011, 0.0
        %v2287 = vmax.f32 %v2014, 0.0
        %v2288 = vmax.f32 %v2017, 0.0
        %v2289 = vmax.f32 %v2020, 0.0
        %v2290 = vmax.f32 %v2023, 0.0
        %v2291 = vmax.f32 %v2026, 0.0
        %v2292 = vmax.f32 %v2029, 0.0
        %v2293 = vmax.f32 %v2032, 0.0
        %v2294 = vmax.f32 %v2035, 0.0
        %v2295 = vmax.f32 %v2038, 0.0
        %v2296 = vadd.f32 %v2040, %v2041
        %v2297 = vadd.f32 %v2296, %v2042
        %v2298 = vadd.f32 %v2297, %v2043
        %v2299 = vadd.f32 %v2298, %v2044
        %v2300 = vadd.f32 %v2299, %v2045
        %v2301 = vadd.f32 %v2300, %v2046
        %v2302 = vadd.f32 %v2301, %v2047
        %v2303 = vadd.f32 %v2302, %v2048
        %v2304 = vadd.f32 %v2303, %v2049
        %v2305 = vadd.f32 %v2304, %v2050
        %v2306 = vadd.f32 %v2305, %v2051
        %v2307 = vadd.f32 %v2306, %v2052
        %v2308 = vadd.f32 %v2307, %v2053
        %v2309 = vadd.f32 %v2308, %v2054
        %v2310 = vadd.f32 %v2309, %v2055
        %v2311 = vadd.f32 %v2310, %v2056
        %v2312 = vadd.f32 %v2311, %v2057
        %v2313 = vadd.f32 %v2312, %v2058
        %v2314 = vadd.f32 %v2313, %v2059
        %v2315 = vadd.f32 %v2314, %v2060
        %v2316 = vadd.f32 %v2315, %v2061
        %v2317 = vadd.f32 %v2316, %v2062
        %v2318 = vadd.f32 %v2317, %v2063
        %v2319 = vadd.f32 %v2318, %v2064
        %v2320 = vadd.f32 %v2319, %v2065
        %v2321 = vadd.f32 %v2320, %v2066
        %v2322 = vadd.f32 %v2321, %v2067
        %v2323 = vadd.f32 %v2322, %v2068
        %v2324 = vadd.f32 %v2323, %v2069
        %v2325 = vadd.f32 %v2324, %v2070
        %v2326 = vadd.f32 %v2325, %v2071
        %v2327 = vrot.slane %v2326, 4
        %v2328 = vadd.f32 %v2326, %v2327
        %v2329 = vrot.slane %v2328, 2
        %v2330 = vadd.f32 %v2328, %v2329
        %v2331 = vrot.slane %v2330, 1
        %v2332 = vadd.f32 %v2330, %v2331
        %v2333 = vadd.f32 %v2072, %v2073
        %v2334 = vadd.f32 %v2333, %v2074
        %v2335 = vadd.f32 %v2334, %v2075
        %v2336 = vadd.f32 %v2335, %v2076
        %v2337 = vadd.f32 %v2336, %v2077
        %v2338 = vadd.f32 %v2337, %v2078
        %v2339 = vadd.f32 %v2338, %v2079
        %v2340 = vadd.f32 %v2339, %v2080
        %v2341 = vadd.f32 %v2340, %v2081
        %v2342 = vadd.f32 %v2341, %v2082
        %v2343 = vadd.f32 %v2342, %v2083
        %v2344 = vadd.f32 %v2343, %v2084
        %v2345 = vadd.f32 %v2344, %v2085
        %v2346 = vadd.f32 %v2345, %v2086
        %v2347 = vadd.f32 %v2346, %v2087
        %v2348 = vadd.f32 %v2347, %v2088
        %v2349 = vadd.f32 %v2348, %v2089
        %v2350 = vadd.f32 %v2349, %v2090
        %v2351 = vadd.f32 %v2350, %v2091
        %v2352 = vadd.f32 %v2351, %v2092
        %v2353 = vadd.f32 %v2352, %v2093
        %v2354 = vadd.f32 %v2353, %v2094
        %v2355 = vadd.f32 %v2354, %v2095
        %v2356 = vadd.f32 %v2355, %v2096
        %v2357 = vadd.f32 %v2356, %v2097
        %v2358 = vadd.f32 %v2357, %v2098
        %v2359 = vadd.f32 %v2358, %v2099
        %v2360 = vadd.f32 %v2359, %v2100
        %v2361 = vadd.f32 %v2360, %v2101
        %v2362 = vadd.f32 %v2361, %v2102
        %v2363 = vadd.f32 %v2362, %v2103
        %v2364 = vrot.slane %v2363, 4
        %v2365 = vadd.f32 %v2363, %v2364
        %v2366 = vrot.slane %v2365, 2
        %v2367 = vadd.f32 %v2365, %v2366
        %v2368 = vrot.slane %v2367, 1
        %v2369 = vadd.f32 %v2367, %v2368
        %v2370 = vadd.f32 %v2104, %v2105
        %v2371 = vadd.f32 %v2370, %v2106
        %v2372 = vadd.f32 %v2371, %v2107
        %v2373 = vadd.f32 %v2372, %v2108
        %v2374 = vadd.f32 %v2373, %v2109
        %v2375 = vadd.f32 %v2374, %v2110
        %v2376 = vadd.f32 %v2375, %v2111
        %v2377 = vadd.f32 %v2376, %v2112
        %v2378 = vadd.f32 %v2377, %v2113
        %v2379 = vadd.f32 %v2378, %v2114
        %v2380 = vadd.f32 %v2379, %v2115
        %v2381 = vadd.f32 %v2380, %v2116
        %v2382 = vadd.f32 %v2381, %v2117
        %v2383 = vadd.f32 %v2382, %v2118
        %v2384 = vadd.f32 %v2383, %v2119
        %v2385 = vadd.f32 %v2384, %v2120
        %v2386 = vadd.f32 %v2385, %v2121
        %v2387 = vadd.f32 %v2386, %v2122
        %v2388 = vadd.f32 %v2387, %v2123
        %v2389 = vadd.f32 %v2388, %v2124
        %v2390 = vadd.f32 %v2389, %v2125
        %v2391 = vadd.f32 %v2390, %v2126
        %v2392 = vadd.f32 %v2391, %v2127
        %v2393 = vadd.f32 %v2392, %v2128
        %v2394 = vadd.f32 %v2393, %v2129
        %v2395 = vadd.f32 %v2394, %v2130
        %v2396 = vadd.f32 %v2395, %v2131
        %v2397 = vadd.f32 %v2396, %v2132
        %v2398 = vadd.f32 %v2397, %v2133
        %v2399 = vadd.f32 %v2398, %v2134
        %v2400 = vadd.f32 %v2399, %v2135
        %v2401 = vrot.slane %v2400, 4
        %v2402 = vadd.f32 %v2400, %v2401
        %v2403 = vrot.slane %v2402, 2
        %v2404 = vadd.f32 %v2402, %v2403
        %v2405 = vrot.slane %v2404, 1
        %v2406 = vadd.f32 %v2404, %v2405
        %v2407 = vadd.f32 %v2136, %v2137
        %v2408 = vadd.f32 %v2407, %v2138
        %v2409 = vadd.f32 %v2408, %v2139
        %v2410 = vadd.f32 %v2409, %v2140
        %v2411 = vadd.f32 %v2410, %v2141
        %v2412 = vadd.f32 %v2411, %v2142
        %v2413 = vadd.f32 %v2412, %v2143
        %v2414 = vadd.f32 %v2413, %v2144
        %v2415 = vadd.f32 %v2414, %v2145
        %v2416 = vadd.f32 %v2415, %v2146
        %v2417 = vadd.f32 %v2416, %v2147
        %v2418 = vadd.f32 %v2417, %v2148
        %v2419 = vadd.f32 %v2418, %v2149
        %v2420 = vadd.f32 %v2419, %v2150
        %v2421 = vadd.f32 %v2420, %v2151
        %v2422 = vadd.f32 %v2421, %v2152
        %v2423 = vadd.f32 %v2422, %v2153
        %v2424 = vadd.f32 %v2423, %v2154
        %v2425 = vadd.f32 %v2424, %v2155
        %v2426 = vadd.f32 %v2425, %v2156
        %v2427 = vadd.f32 %v2426, %v2157
        %v2428 = vadd.f32 %v2427, %v2158
        %v2429 = vadd.f32 %v2428, %v2159
        %v2430 = vadd.f32 %v2429, %v2160
        %v2431 = vadd.f32 %v2430, %v2161
        %v2432 = vadd.f32 %v2431, %v2162
        %v2433 = vadd.f32 %v2432, %v2163
        %v2434 = vadd.f32 %v2433, %v2164
        %v2435 = vadd.f32 %v2434, %v2165
        %v2436 = vadd.f32 %v2435, %v2166
        %v2437 = vadd.f32 %v2436, %v2167
        %v2438 = vrot.slane %v2437, 4
        %v2439 = vadd.f32 %v2437, %v2438
        %v2440 = vrot.slane %v2439, 2
        %v2441 = vadd.f32 %v2439, %v2440
        %v2442 = vrot.slane %v2441, 1
        %v2443 = vadd.f32 %v2441, %v2442
        %v2444 = vadd.f32 %v2168, %v2169
        %v2445 = vadd.f32 %v2444, %v2170
        %v2446 = vadd.f32 %v2445, %v2171
        %v2447 = vadd.f32 %v2446, %v2172
        %v2448 = vadd.f32 %v2447, %v2173
        %v2449 = vadd.f32 %v2448, %v2174
        %v2450 = vadd.f32 %v2449, %v2175
        %v2451 = vadd.f32 %v2450, %v2176
        %v2452 = vadd.f32 %v2451, %v2177
        %v2453 = vadd.f32 %v2452, %v2178
        %v2454 = vadd.f32 %v2453, %v2179
        %v2455 = vadd.f32 %v2454, %v2180
        %v2456 = vadd.f32 %v2455, %v2181
        %v2457 = vadd.f32 %v2456, %v2182
        %v2458 = vadd.f32 %v2457, %v2183
        %v2459 = vadd.f32 %v2458, %v2184
        %v2460 = vadd.f32 %v2459, %v2185
        %v2461 = vadd.f32 %v2460, %v2186
        %v2462 = vadd.f32 %v2461, %v2187
        %v2463 = vadd.f32 %v2462, %v2188
        %v2464 = vadd.f32 %v2463, %v2189
        %v2465 = vadd.f32 %v2464, %v2190
        %v2466 = vadd.f32 %v2465, %v2191
        %v2467 = vadd.f32 %v2466, %v2192
        %v2468 = vadd.f32 %v2467, %v2193
        %v2469 = vadd.f32 %v2468, %v2194
        %v2470 = vadd.f32 %v2469, %v2195
        %v2471 = vadd.f32 %v2470, %v2196
        %v2472 = vadd.f32 %v2471, %v2197
        %v2473 = vadd.f32 %v2472, %v2198
        %v2474 = vadd.f32 %v2473, %v2199
        %v2475 = vrot.slane %v2474, 4
        %v2476 = vadd.f32 %v2474, %v2475
        %v2477 = vrot.slane %v2476, 2
        %v2478 = vadd.f32 %v2476, %v2477
        %v2479 = vrot.slane %v2478, 1
        %v2480 = vadd.f32 %v2478, %v2479
        %v2481 = vadd.f32 %v2200, %v2201
        %v2482 = vadd.f32 %v2481, %v2202
        %v2483 = vadd.f32 %v2482, %v2203
        %v2484 = vadd.f32 %v2483, %v2204
        %v2485 = vadd.f32 %v2484, %v2205
        %v2486 = vadd.f32 %v2485, %v2206
        %v2487 = vadd.f32 %v2486, %v2207
        %v2488 = vadd.f32 %v2487, %v2208
        %v2489 = vadd.f32 %v2488, %v2209
        %v2490 = vadd.f32 %v2489, %v2210
        %v2491 = vadd.f32 %v2490, %v2211
        %v2492 = vadd.f32 %v2491, %v2212
        %v2493 = vadd.f32 %v2492, %v2213
        %v2494 = vadd.f32 %v2493, %v2214
        %v2495 = vadd.f32 %v2494, %v2215
        %v2496 = vadd.f32 %v2495, %v2216
        %v2497 = vadd.f32 %v2496, %v2217
        %v2498 = vadd.f32 %v2497, %v2218
        %v2499 = vadd.f32 %v2498, %v2219
        %v2500 = vadd.f32 %v2499, %v2220
        %v2501 = vadd.f32 %v2500, %v2221
        %v2502 = vadd.f32 %v2501, %v2222
        %v2503 = vadd.f32 %v2502, %v2223
        %v2504 = vadd.f32 %v2503, %v2224
        %v2505 = vadd.f32 %v2504, %v2225
        %v2506 = vadd.f32 %v2505, %v2226
        %v2507 = vadd.f32 %v2506, %v2227
        %v2508 = vadd.f32 %v2507, %v2228
        %v2509 = vadd.f32 %v2508, %v2229
        %v2510 = vadd.f32 %v2509, %v2230
        %v2511 = vadd.f32 %v2510, %v2231
        %v2512 = vrot.slane %v2511, 4
        %v2513 = vadd.f32 %v2511, %v2512
        %v2514 = vrot.slane %v2513, 2
        %v2515 = vadd.f32 %v2513, %v2514
        %v2516 = vrot.slane %v2515, 1
        %v2517 = vadd.f32 %v2515, %v2516
        %v2518 = vadd.f32 %v2232, %v2233
        %v2519 = vadd.f32 %v2518, %v2234
        %v2520 = vadd.f32 %v2519, %v2235
        %v2521 = vadd.f32 %v2520, %v2236
        %v2522 = vadd.f32 %v2521, %v2237
        %v2523 = vadd.f32 %v2522, %v2238
        %v2524 = vadd.f32 %v2523, %v2239
        %v2525 = vadd.f32 %v2524, %v2240
        %v2526 = vadd.f32 %v2525, %v2241
        %v2527 = vadd.f32 %v2526, %v2242
        %v2528 = vadd.f32 %v2527, %v2243
        %v2529 = vadd.f32 %v2528, %v2244
        %v2530 = vadd.f32 %v2529, %v2245
        %v2531 = vadd.f32 %v2530, %v2246
        %v2532 = vadd.f32 %v2531, %v2247
        %v2533 = vadd.f32 %v2532, %v2248
        %v2534 = vadd.f32 %v2533, %v2249
        %v2535 = vadd.f32 %v2534, %v2250
        %v2536 = vadd.f32 %v2535, %v2251
        %v2537 = vadd.f32 %v2536, %v2252
        %v2538 = vadd.f32 %v2537, %v2253
        %v2539 = vadd.f32 %v2538, %v2254
        %v2540 = vadd.f32 %v2539, %v2255
        %v2541 = vadd.f32 %v2540, %v2256
        %v2542 = vadd.f32 %v2541, %v2257
        %v2543 = vadd.f32 %v2542, %v2258
        %v2544 = vadd.f32 %v2543, %v2259
        %v2545 = vadd.f32 %v2544, %v2260
        %v2546 = vadd.f32 %v2545, %v2261
        %v2547 = vadd.f32 %v2546, %v2262
        %v2548 = vadd.f32 %v2547, %v2263
        %v2549 = vrot.slane %v2548, 4
        %v2550 = vadd.f32 %v2548, %v2549
        %v2551 = vrot.slane %v2550, 2
        %v2552 = vadd.f32 %v2550, %v2551
        %v2553 = vrot.slane %v2552, 1
        %v2554 = vadd.f32 %v2552, %v2553
        %v2555 = vadd.f32 %v2264, %v2265
        %v2556 = vadd.f32 %v2555, %v2266
        %v2557 = vadd.f32 %v2556, %v2267
        %v2558 = vadd.f32 %v2557, %v2268
        %v2559 = vadd.f32 %v2558, %v2269
        %v2560 = vadd.f32 %v2559, %v2270
        %v2561 = vadd.f32 %v2560, %v2271
        %v2562 = vadd.f32 %v2561, %v2272
        %v2563 = vadd.f32 %v2562, %v2273
        %v2564 = vadd.f32 %v2563, %v2274
        %v2565 = vadd.f32 %v2564, %v2275
        %v2566 = vadd.f32 %v2565, %v2276
        %v2567 = vadd.f32 %v2566, %v2277
        %v2568 = vadd.f32 %v2567, %v2278
        %v2569 = vadd.f32 %v2568, %v2279
        %v2570 = vadd.f32 %v2569, %v2280
        %v2571 = vadd.f32 %v2570, %v2281
        %v2572 = vadd.f32 %v2571, %v2282
        %v2573 = vadd.f32 %v2572, %v2283
        %v2574 = vadd.f32 %v2573, %v2284
        %v2575 = vadd.f32 %v2574, %v2285
        %v2576 = vadd.f32 %v2575, %v2286
        %v2577 = vadd.f32 %v2576, %v2287
        %v2578 = vadd.f32 %v2577, %v2288
        %v2579 = vadd.f32 %v2578, %v2289
        %v2580 = vadd.f32 %v2579, %v2290
        %v2581 = vadd.f32 %v2580, %v2291
        %v2582 = vadd.f32 %v2581, %v2292
        %v2583 = vadd.f32 %v2582, %v2293
        %v2584 = vadd.f32 %v2583, %v2294
        %v2585 = vadd.f32 %v2584, %v2295
        %v2586 = vrot.slane %v2585, 4
        %v2587 = vadd.f32 %v2585, %v2586
        %v2588 = vrot.slane %v2587, 2
        %v2589 = vadd.f32 %v2587, %v2588
        %v2590 = vrot.slane %v2589, 1
        %v2591 = vadd.f32 %v2589, %v2590
        %v2592 = vrcp.pop 256.0
        %v2593 = vmul.f32 256.0, %v2592
        %v2594 = vsub.f32 1.0, %v2593
        %v2595 = vmul.f32 %v2592, %v2594
        %v2596 = vadd.f32 %v2592, %v2595
        %vm2597 = vweird.f32 %v2592
        %v2598 = vsel %vm2597, %v2592, %v2596
        %v2599 = vmul.f32 %v2332, %v2598
        %v2600 = vmul.f32 %v2369, %v2598
        %v2601 = vmul.f32 %v2406, %v2598
        %v2602 = vmul.f32 %v2443, %v2598
        %v2603 = vmul.f32 %v2480, %v2598
        %v2604 = vmul.f32 %v2517, %v2598
        %v2605 = vmul.f32 %v2554, %v2598
        %v2606 = vmul.f32 %v2591, %v2598
        %v2607 = vld [vmem:[%s3] sm:$0xff]
        %v2608 = vld [vmem:[%s3 + $0x8] sm:$0xff]
        %v2609 = vld [vmem:[%s3 + $0x10] sm:$0xff]
        %v2610 = vld [vmem:[%s3 + $0x18] sm:$0xff]
        %v2611 = vld [vmem:[%s3 + $0x20] sm:$0xff]
        %v2612 = vld [vmem:[%s3 + $0x28] sm:$0xff]
        %v2613 = vld [vmem:[%s3 + $0x30] sm:$0xff]
        %v2614 = vld [vmem:[%s3 + $0x38] sm:$0xff]
        %v2615 = vld [vmem:[%s3 + $0x40] sm:$0xff]
        %v2616 = vld [vmem:[%s3 + $0x48] sm:$0xff]
        %v2617 = vld [vmem:[%s3 + $0x50] sm:$0xff]
        %v2618 = vld [vmem:[%s3 + $0x58] sm:$0xff]
        %v2619 = vld [vmem:[%s3 + $0x60] sm:$0xff]
        %v2620 = vld [vmem:[%s3 + $0x68] sm:$0xff]
        %v2621 = vld [vmem:[%s3 + $0x70] sm:$0xff]
        %v2622 = vld [vmem:[%s3 + $0x78] sm:$0xff]
        %v2623 = vld [vmem:[%s4] sm:$0x1]
        %v2625 = vperm.slane %v2623, 0
        %vm2635 = vcmask 1041409
        %v2636 = vsel %vm2635, %v2600, %v2599
        %vm2637 = vcmask 1042434
        %v2638 = vsel %vm2637, %v2601, %v2636
        %vm2639 = vcmask 1043459
        %v2640 = vsel %vm2639, %v2602, %v2638
        %vm2641 = vcmask 1044484
        %v2642 = vsel %vm2641, %v2603, %v2640
        %vm2643 = vcmask 1045509
        %v2644 = vsel %vm2643, %v2604, %v2642
        %vm2645 = vcmask 1046534
        %v2646 = vsel %vm2645, %v2605, %v2644
        %vm2647 = vcmask 1047559
        %v2648 = vsel %vm2647, %v2606, %v2646
        %2650 = vmatpush.msra.mxu0 %v2622
        %2651 = vmatpush.msra.mxu0 %v2621
        %2652 = vmatpush.msra.mxu0 %v2620
        %2653 = vmatpush.msra.mxu0 %v2619
        %2654 = vmatpush.msra.mxu0 %v2618
        %2655 = vmatpush.msra.mxu0 %v2617
        %2656 = vmatpush.msra.mxu0 %v2616
        %2657 = vmatpush.msra.mxu0 %v2615
        %2658 = vmatpush.msra.mxu0 %v2614
        %2659 = vmatpush.msra.mxu0 %v2613
        %2660 = vmatpush.msra.mxu0 %v2612
        %2661 = vmatpush.msra.mxu0 %v2611
        %2662 = vmatpush.msra.mxu0 %v2610
        %2663 = vmatpush.msra.mxu0 %v2609
        %2664 = vmatpush.msra.mxu0 %v2608
        %2665 = vmatpush.msra.mxu0 %v2607
        %2666 = vmatmul.f32.gmra.mxu0 %v2648
        %v2667 = vpop.f32.mrf.mxu0
        %v2668 = vadd.f32 %v2625, %v2667
        %2669 = vdwg.mxu0
        %v2670 = vrot.slane %v2668, 4
        %v2671 = vadd.f32 %v2668, %v2670
        %v2672 = vrot.slane %v2671, 2
        %v2673 = vadd.f32 %v2671, %v2672
        %v2674 = vrot.slane %v2673, 1
        %v2675 = vadd.f32 %v2673, %v2674
        %v2676 = vrcp.pop 8.0
        %v2677 = vmul.f32 8.0, %v2676
        %v2678 = vsub.f32 1.0, %v2677
        %v2679 = vmul.f32 %v2676, %v2678
        %v2680 = vadd.f32 %v2676, %v2679
        %vm2681 = vweird.f32 %v2676
        %v2682 = vsel %vm2681, %v2676, %v2680
        %v2683 = vmul.f32 %v2675, %v2682
        %2684 = vst [vmem:[%s216] sm:$0x1] %v2683
        %s2685 = sand.u32 %s137, 1
        %s2686 = scalar_lea.sflag [#allocation3], %s2685
        %s2687 = sand.u32 %s137, 1
        %s2688 = scalar_lea.vmem [#allocation2], %s2687
        // Predicated region
        $region41: #{tsn_forward.1} parent=39 // pred_check
          %p2689 = pneg %p147
        $region42: #{tsn_forward.1} parent=39 // pred_check_branch
          %2691 = sbr.rel (%p2689) target = $region44
        $region43: #{tsn_forward.1} parent=39 // pred_region
          %2693 = vsyncadd %s2686, 0
          %s2694 = scalar_lea.hbm %s5, %s19
          %s2696 = sshll.u32 %s2688, 4
          %s2697 = int_to_ptr.vmem [resolvable:$true] %s2696
          %s2698 = sshll.u32 %s2694, 4
          %s2699 = int_to_ptr.hbm [resolvable:$true] %s2698
          %2701 = dma.vmem_to_hbm [thread:$0]  %s2697, 16, %s2699, %s2686
        $region44: #{tsn_forward.1} parent=39 // pred_fallthru
          _
      $region40: #{tsn_forward.1} parent=5 // pred_fallthru
        _
      %p2702 = scmp.le.s32.totalorder 2, %s14
      // Predicated region
      $region45: #{tsn_forward.1} parent=5 // pred_check
        %p2703 = pneg %p2702
      $region46: #{tsn_forward.1} parent=5 // pred_check_branch
        %2705 = sbr.rel (%p2703) target = $region48
      $region47: #{tsn_forward.1} parent=5 // pred_region
        %s2706 = ssub.s32 %s14, 2
        // Predicated region
        $region49: #{tsn_forward.1} parent=47 // pred_check
          %p2707 = pneg %p153
        $region50: #{tsn_forward.1} parent=47 // pred_check_branch
          %2709 = sbr.rel (%p2707) target = $region52
        $region51: #{tsn_forward.1} parent=47 // pred_region
          %s2710 = sand.u32 %s138, 1
          %s2711 = scalar_lea.sflag [#allocation3], %s2710
          %s2712 = sand.u32 %s138, 1
          %s2713 = scalar_lea.vmem [#allocation2], %s2712
          %2715 = dma.done %s2711, 16
        $region52: #{tsn_forward.1} parent=47 // pred_fallthru
          _
      $region48: #{tsn_forward.1} parent=5 // pred_fallthru
        _
    $region6: #{tsn_forward.1} parent=1 // loop_footer
      %s18 = sadd.s32 1, %s14
    $region7: #{tsn_forward.1} parent=1 // loop_footer_branch
      %13 = sbr.rel target = $region3
    $region8: #{tsn_forward.1} parent=1 // loop_exit
      _
    %2716 = vsyncpa [#allocation3], 1
    %s2717 = scalar_lea.sflag [#allocation3], 1
    %2718 = vsyncpa %s2717, 1

</llo_original>
